<compile_context>
chip_gen: v5e
topology: v5e:2x2
jax: 0.10.0
libtpu: 0.0.40
codegen_flags: <defaults>
</compile_context>

<pallas_src>
import functools

import jax
import jax.numpy as jnp
from jax.experimental import pallas as pl
from jax.experimental.pallas import tpu as pltpu


def _dconv_fused_kernel(masks_ref, x_ref, w1_ref, b1_ref, w2_ref, b2_ref,
                        o_ref, pt_ref, *, N, H, W, Cin, Cout, Cpad):
    """Fused (conv3x3 + folded-BN + ReLU) x 2 over the whole (batch-folded) image set.

    masks_ref: (9, 1, L) f32 per-tap halo validity masks (1.0 inside, 0.0 at halo)
    x_ref:     (N, Cpad, P) f32 channel-padded input, P = H*W (lane axis)
    w1_ref:    (Cpad, 9*Cpad) bf16 conv1 weights * BN1 scale, col = tap*Cpad + ci
    b1_ref:    (Cpad, 1) f32 folded BN1 bias (absorbs conv bias / mean / beta)
    w2_ref:    (Cpad, 9*Cpad) bf16 conv2 weights * BN2 scale
    b2_ref:    (Cpad, 1) f32
    o_ref:     (N, Cout, P) output (lane-dense: P multiple of 128)
    pt_ref:    (9*Cpad, L) bf16 VMEM scratch - im2col matrix, shared by both convs
    """
    P = H * W            # lanes per image
    L = N * P            # folded lane width
    taps = [(dh, dw) for dh in (-1, 0, 1) for dw in (-1, 0, 1)]

    def build_im2col(z):
        # z: (Cpad, L) f32.  For each of the 9 taps: lane-rotate with the XLU,
        # zero the halo with the per-tap mask, cast to bf16 and store as a
        # 16-row (bf16-tile aligned) block of the shared scratch.
        for t, (dh, dw) in enumerate(taps):
            s = dh * W + dw
            if s == 0:
                tap = z                              # center tap: no shift, no halo
            else:
                # pltpu.roll matches jnp.roll: out[:, p] = z[:, (p - shift) % L],
                # so shift = (-s) % L gives tap[:, p] = z[:, (p + s) % L].
                tap = pltpu.roll(z, (-s) % L, 1)
                tap = tap * masks_ref[t]             # (1, L) mask, sublane broadcast
            pt_ref[t * Cpad:(t + 1) * Cpad, :] = tap.astype(jnp.bfloat16)

    def conv_bn_relu(z, w_ref, b_ref):
        build_im2col(z)
        # Single MXU matmul per conv: (Cpad, 9*Cpad) x (9*Cpad, L) -> (Cpad, L),
        # bf16 operands straight from the bf16 scratch, f32 accumulation.
        acc = jnp.dot(w_ref[...], pt_ref[...], preferred_element_type=jnp.float32)
        # BN scale is folded into the weights; only bias-add + ReLU remain (f32).
        return jnp.maximum(acc + b_ref[...], 0.0)

    # Fold the batch into the lane axis (aligned lane concat at multiples of P).
    # The halo masks already zero any cross-image wrap of the circular rotation.
    imgs = [x_ref[n] for n in range(N)]                       # each (Cpad, P)
    x_cat = imgs[0] if N == 1 else jnp.concatenate(imgs, axis=-1)   # (Cpad, L)

    h1 = conv_bn_relu(x_cat, w1_ref, b1_ref)   # (Cpad, L); padded channels stay 0
    y = conv_bn_relu(h1, w2_ref, b2_ref)       # (Cpad, L); block-1 act never leaves VMEM

    # Un-fold the batch: per-image lane slices are P-aligned (P % 128 == 0).
    for n in range(N):
        o_ref[n] = y[:Cout, n * P:(n + 1) * P].astype(o_ref.dtype)


def _fold_bn_into_weights(w_hwio, conv_b, gamma, beta, mean, var,
                          cin, cout, cpad, eps=1e-5):
    """Fold conv bias + BatchNorm(eval) into the conv.

    Returns:
      wt:   (cpad, 9*cpad) bf16, row = out channel, col = (kh*3+kw)*cpad + ci,
            scaled by gamma/sqrt(var+eps), zero-padded channels.
      bias: (cpad, 1) f32, (conv_b - mean)*scale + beta, zero-padded.
    """
    s = gamma / jnp.sqrt(var + eps)                                   # (cout,)
    wf = w_hwio.astype(jnp.float32) * s[None, None, None, :]          # (3,3,cin,cout)
    wp = jnp.zeros((3, 3, cpad, cpad), jnp.float32).at[:, :, :cin, :cout].set(wf)
    wt = wp.reshape(9 * cpad, cpad).T.astype(jnp.bfloat16)            # (cpad, 9*cpad)
    b = (conv_b - mean) * s + beta
    bias = jnp.zeros((cpad, 1), jnp.float32).at[:cout, 0].set(b)
    return wt, bias


def dconv_forward(x_nchw, params):
    """DConv forward (inference). x_nchw: (N, Cin, H, W) -> (N, Cout, H, W)."""
    N, Cin, H, W = x_nchw.shape
    Cout = params["w1"].shape[-1]
    P = H * W
    L = N * P
    # TODO(synk): pad the spatial axis in the wrapper when H*W is not a multiple of 128.
    assert P % 128 == 0, "H*W must be a multiple of 128 for lane-dense blocks"

    # Pad channels to a multiple of 16 (bf16 sublane tile) so every tap block of
    # the bf16 im2col scratch is a full, unmasked tile store.  This is a tiny
    # channel pad (not a spatial halo pad) and fuses with the reshape.
    Cpad = ((max(Cin, Cout) + 15) // 16) * 16

    x_flat = x_nchw.reshape(N, Cin, P)                 # free reshape
    if Cpad > Cin:
        x_flat = jnp.pad(x_flat, ((0, 0), (0, Cpad - Cin), (0, 0)))

    w1t, b1 = _fold_bn_into_weights(params["w1"], params["b1"], params["bn1_gamma"],
                                    params["bn1_beta"], params["bn1_mean"],
                                    params["bn1_var"], Cin, Cout, Cpad)
    w2t, b2 = _fold_bn_into_weights(params["w2"], params["b2"], params["bn2_gamma"],
                                    params["bn2_beta"], params["bn2_mean"],
                                    params["bn2_var"], Cout, Cout, Cpad)

    # Per-tap halo validity masks over the folded lane axis (pattern repeats per
    # image).  Built on the host: in-kernel iota generation would need vector
    # int32 //,% which we avoid for lowering portability.  Shaped (9, 1, L) so
    # each tap mask is a leading-index read (no per-tap sublane extraction).
    pid = jnp.arange(P, dtype=jnp.int32)
    hh, ww = pid // W, pid % W
    masks_img = jnp.stack(
        [((hh + dh >= 0) & (hh + dh < H) & (ww + dw >= 0) & (ww + dw < W))
         for dh in (-1, 0, 1) for dw in (-1, 0, 1)]
    ).astype(jnp.float32)                                            # (9, P)
    masks = jnp.tile(masks_img, (1, N)).reshape(9, 1, L)

    kernel = functools.partial(_dconv_fused_kernel, N=N, H=H, W=W,
                               Cin=Cin, Cout=Cout, Cpad=Cpad)

    out_flat = pl.pallas_call(
        kernel,
        out_shape=jax.ShapeDtypeStruct((N, Cout, P), x_nchw.dtype),
        grid_spec=pltpu.PrefetchScalarGridSpec(
            num_scalar_prefetch=0,
            grid=(1,),
            in_specs=[
                pl.BlockSpec((9, 1, L), lambda i: (0, 0, 0)),          # halo masks
                pl.BlockSpec((N, Cpad, P), lambda i: (0, 0, 0)),       # x (channel-padded)
                pl.BlockSpec((Cpad, 9 * Cpad), lambda i: (0, 0)),      # w1 (BN folded)
                pl.BlockSpec((Cpad, 1), lambda i: (0, 0)),             # b1
                pl.BlockSpec((Cpad, 9 * Cpad), lambda i: (0, 0)),      # w2 (BN folded)
                pl.BlockSpec((Cpad, 1), lambda i: (0, 0)),             # b2
            ],
            out_specs=pl.BlockSpec((N, Cout, P), lambda i: (0, 0, 0)),
            scratch_shapes=[
                pltpu.VMEM((9 * Cpad, L), jnp.bfloat16),               # shared im2col
            ],
        ),
        compiler_params=pltpu.CompilerParams(
            dimension_semantics=("arbitrary",),
        ),
    )(masks, x_flat, w1t, b1, w2t, b2)

    # Free reshape back to NCHW.
    return out_flat.reshape(N, Cout, H, W)


def init_params(key, in_ch, out_ch):
    ks = jax.random.split(key, 6)
    params = {
        # conv weights in HWIO layout (kh, kw, in, out)
        "w1": 0.1 * jax.random.normal(ks[0], (3, 3, in_ch, out_ch), jnp.float32),
        "b1": 0.05 * jax.random.normal(ks[1], (out_ch,), jnp.float32),
        "bn1_gamma": 1.0 + 0.1 * jax.random.normal(ks[2], (out_ch,), jnp.float32),
        "bn1_beta": 0.1 * jax.random.normal(ks[3], (out_ch,), jnp.float32),
        "bn1_mean": 0.05 * jax.random.normal(ks[4], (out_ch,), jnp.float32),
        "bn1_var": jnp.abs(1.0 + 0.1 * jax.random.normal(ks[5], (out_ch,), jnp.float32)),
    }
    ks2 = jax.random.split(jax.random.fold_in(key, 1), 6)
    params.update({
        "w2": 0.1 * jax.random.normal(ks2[0], (3, 3, out_ch, out_ch), jnp.float32),
        "b2": 0.05 * jax.random.normal(ks2[1], (out_ch,), jnp.float32),
        "bn2_gamma": 1.0 + 0.1 * jax.random.normal(ks2[2], (out_ch,), jnp.float32),
        "bn2_beta": 0.1 * jax.random.normal(ks2[3], (out_ch,), jnp.float32),
        "bn2_mean": 0.05 * jax.random.normal(ks2[4], (out_ch,), jnp.float32),
        "bn2_var": jnp.abs(1.0 + 0.1 * jax.random.normal(ks2[5], (out_ch,), jnp.float32)),
    })
    return params


def _reference_forward(x_nchw, params, eps=1e-5):
    """Pure-JAX f32 reference with exact eval-mode module semantics
    (conv + bias, BatchNorm with running stats, ReLU, twice)."""
    def block(x, w, b, g, beta, mean, var):
        y = jax.lax.conv_general_dilated(
            x, w, window_strides=(1, 1), padding=((1, 1), (1, 1)),
            dimension_numbers=("NCHW", "HWIO", "NCHW"),
            precision=jax.lax.Precision.HIGHEST)
        y = y + b[None, :, None, None]
        s = g / jnp.sqrt(var + eps)
        y = (y - mean[None, :, None, None]) * s[None, :, None, None] + beta[None, :, None, None]
        return jnp.maximum(y, 0.0)

    y = block(x_nchw, params["w1"], params["b1"], params["bn1_gamma"],
              params["bn1_beta"], params["bn1_mean"], params["bn1_var"])
    y = block(y, params["w2"], params["b2"], params["bn2_gamma"],
              params["bn2_beta"], params["bn2_mean"], params["bn2_var"])
    return y


if __name__ == "__main__":
    key = jax.random.PRNGKey(0)
    N, in_ch, out_ch, H, W = 2, 4, 8, 16, 16

    k_x, k_p = jax.random.split(key)
    x = jax.random.normal(k_x, (N, in_ch, H, W), jnp.float32)
    params = init_params(k_p, in_ch, out_ch)

    out = jax.block_until_ready(dconv_forward(x, params))
    ref = jax.block_until_ready(_reference_forward(x, params))

    assert out.shape == (N, out_ch, H, W)
    # Kernel uses bf16 MXU operands (weights/activations) vs. the f32 reference.
    err = float(jnp.max(jnp.abs(out - ref)))
    assert err < 3e-2, f"Pallas output mismatch vs reference (max abs err {err})"

    print("KERNEL_OK")
</pallas_src>

<mosaic_0001>
module attributes {stable_mosaic.version = 11 : i64} {
  func.func @_dconv_fused_kernel(%arg0: i32, %arg1: memref<9x1x512xf32, #tpu.memory_space<vmem>>, %arg2: memref<2x16x256xf32, #tpu.memory_space<vmem>>, %arg3: memref<16x144xbf16, #tpu.memory_space<vmem>>, %arg4: memref<16x1xf32, #tpu.memory_space<vmem>>, %arg5: memref<16x144xbf16, #tpu.memory_space<vmem>>, %arg6: memref<16x1xf32, #tpu.memory_space<vmem>>, %arg7: memref<2x8x256xf32, #tpu.memory_space<vmem>>, %arg8: memref<144x512xbf16, #tpu.memory_space<vmem>>) attributes {dimension_semantics = [#tpu.dimension_semantics<arbitrary>], iteration_bounds = array<i64: 1>, scalar_prefetch = 0 : i64, scratch_operands = 1 : i64, tpu.core_type = #tpu.core_type<tc>, window_params = [{pipeline_mode = #tpu.pipeline_mode<synchronous>, transform_indices = @transform_0, window_bounds = array<i64: 9, 1, 512>}, {pipeline_mode = #tpu.pipeline_mode<synchronous>, transform_indices = @transform_1, window_bounds = array<i64: 2, 16, 256>}, {pipeline_mode = #tpu.pipeline_mode<synchronous>, transform_indices = @transform_2, window_bounds = array<i64: 16, 144>}, {pipeline_mode = #tpu.pipeline_mode<synchronous>, transform_indices = @transform_3, window_bounds = array<i64: 16, 1>}, {pipeline_mode = #tpu.pipeline_mode<synchronous>, transform_indices = @transform_4, window_bounds = array<i64: 16, 144>}, {pipeline_mode = #tpu.pipeline_mode<synchronous>, transform_indices = @transform_5, window_bounds = array<i64: 16, 1>}, {pipeline_mode = #tpu.pipeline_mode<synchronous>, transform_indices = @transform_6, window_bounds = array<i64: 2, 8, 256>}]} {
    %c0 = arith.constant 0 : index
    %c0_0 = arith.constant 0 : index
    %c0_1 = arith.constant 0 : index
    %0 = vector.load %arg2[%c0, %c0_0, %c0_1] : memref<2x16x256xf32, #tpu.memory_space<vmem>>, vector<1x16x256xf32>
    %1 = vector.shape_cast %0 : vector<1x16x256xf32> to vector<16x256xf32>
    %c1 = arith.constant 1 : index
    %c0_2 = arith.constant 0 : index
    %c0_3 = arith.constant 0 : index
    %2 = vector.load %arg2[%c1, %c0_2, %c0_3] : memref<2x16x256xf32, #tpu.memory_space<vmem>>, vector<1x16x256xf32>
    %3 = vector.shape_cast %2 : vector<1x16x256xf32> to vector<16x256xf32>
    %4 = tpu.concatenate %1, %3 in 1 : vector<16x256xf32>, vector<16x256xf32> -> vector<16x512xf32>
    %c17_i32 = arith.constant 17 : i32
    %5 = tpu.dynamic_rotate %4 by %c17_i32 dim 1 : vector<16x512xf32>, i32 -> vector<16x512xf32>
    %c0_4 = arith.constant 0 : index
    %c0_5 = arith.constant 0 : index
    %c0_6 = arith.constant 0 : index
    %6 = vector.load %arg1[%c0_4, %c0_5, %c0_6] : memref<9x1x512xf32, #tpu.memory_space<vmem>>, vector<1x1x512xf32>
    %7 = vector.shape_cast %6 : vector<1x1x512xf32> to vector<1x512xf32>
    %8 = vector.broadcast %7 : vector<1x512xf32> to vector<16x512xf32>
    %9 = arith.mulf %5, %8 : vector<16x512xf32>
    %10 = arith.truncf %9 : vector<16x512xf32> to vector<16x512xbf16>
    %c0_7 = arith.constant 0 : index
    %c0_8 = arith.constant 0 : index
    %11 = vector.load %arg8[%c0_7, %c0_8] : memref<144x512xbf16, #tpu.memory_space<vmem>>, vector<16x512xbf16>
    tpu.vector_store %arg8[%c0_7, %c0_8], %10 {strides = array<i32>} : memref<144x512xbf16, #tpu.memory_space<vmem>>, vector<16x512xbf16>,
    %c16_i32 = arith.constant 16 : i32
    %12 = tpu.dynamic_rotate %4 by %c16_i32 dim 1 : vector<16x512xf32>, i32 -> vector<16x512xf32>
    %c1_9 = arith.constant 1 : index
    %c0_10 = arith.constant 0 : index
    %c0_11 = arith.constant 0 : index
    %13 = vector.load %arg1[%c1_9, %c0_10, %c0_11] : memref<9x1x512xf32, #tpu.memory_space<vmem>>, vector<1x1x512xf32>
    %14 = vector.shape_cast %13 : vector<1x1x512xf32> to vector<1x512xf32>
    %15 = vector.broadcast %14 : vector<1x512xf32> to vector<16x512xf32>
    %16 = arith.mulf %12, %15 : vector<16x512xf32>
    %17 = arith.truncf %16 : vector<16x512xf32> to vector<16x512xbf16>
    %c16 = arith.constant 16 : index
    %c0_12 = arith.constant 0 : index
    %18 = vector.load %arg8[%c16, %c0_12] : memref<144x512xbf16, #tpu.memory_space<vmem>>, vector<16x512xbf16>
    tpu.vector_store %arg8[%c16, %c0_12], %17 {strides = array<i32>} : memref<144x512xbf16, #tpu.memory_space<vmem>>, vector<16x512xbf16>,
    %c15_i32 = arith.constant 15 : i32
    %19 = tpu.dynamic_rotate %4 by %c15_i32 dim 1 : vector<16x512xf32>, i32 -> vector<16x512xf32>
    %c2 = arith.constant 2 : index
    %c0_13 = arith.constant 0 : index
    %c0_14 = arith.constant 0 : index
    %20 = vector.load %arg1[%c2, %c0_13, %c0_14] : memref<9x1x512xf32, #tpu.memory_space<vmem>>, vector<1x1x512xf32>
    %21 = vector.shape_cast %20 : vector<1x1x512xf32> to vector<1x512xf32>
    %22 = vector.broadcast %21 : vector<1x512xf32> to vector<16x512xf32>
    %23 = arith.mulf %19, %22 : vector<16x512xf32>
    %24 = arith.truncf %23 : vector<16x512xf32> to vector<16x512xbf16>
    %c32 = arith.constant 32 : index
    %c0_15 = arith.constant 0 : index
    %25 = vector.load %arg8[%c32, %c0_15] : memref<144x512xbf16, #tpu.memory_space<vmem>>, vector<16x512xbf16>
    tpu.vector_store %arg8[%c32, %c0_15], %24 {strides = array<i32>} : memref<144x512xbf16, #tpu.memory_space<vmem>>, vector<16x512xbf16>,
    %c1_i32 = arith.constant 1 : i32
    %26 = tpu.dynamic_rotate %4 by %c1_i32 dim 1 : vector<16x512xf32>, i32 -> vector<16x512xf32>
    %c3 = arith.constant 3 : index
    %c0_16 = arith.constant 0 : index
    %c0_17 = arith.constant 0 : index
    %27 = vector.load %arg1[%c3, %c0_16, %c0_17] : memref<9x1x512xf32, #tpu.memory_space<vmem>>, vector<1x1x512xf32>
    %28 = vector.shape_cast %27 : vector<1x1x512xf32> to vector<1x512xf32>
    %29 = vector.broadcast %28 : vector<1x512xf32> to vector<16x512xf32>
    %30 = arith.mulf %26, %29 : vector<16x512xf32>
    %31 = arith.truncf %30 : vector<16x512xf32> to vector<16x512xbf16>
    %c48 = arith.constant 48 : index
    %c0_18 = arith.constant 0 : index
    %32 = vector.load %arg8[%c48, %c0_18] : memref<144x512xbf16, #tpu.memory_space<vmem>>, vector<16x512xbf16>
    tpu.vector_store %arg8[%c48, %c0_18], %31 {strides = array<i32>} : memref<144x512xbf16, #tpu.memory_space<vmem>>, vector<16x512xbf16>,
    %33 = arith.truncf %4 : vector<16x512xf32> to vector<16x512xbf16>
    %c64 = arith.constant 64 : index
    %c0_19 = arith.constant 0 : index
    %34 = vector.load %arg8[%c64, %c0_19] : memref<144x512xbf16, #tpu.memory_space<vmem>>, vector<16x512xbf16>
    tpu.vector_store %arg8[%c64, %c0_19], %33 {strides = array<i32>} : memref<144x512xbf16, #tpu.memory_space<vmem>>, vector<16x512xbf16>,
    %c511_i32 = arith.constant 511 : i32
    %35 = tpu.dynamic_rotate %4 by %c511_i32 dim 1 : vector<16x512xf32>, i32 -> vector<16x512xf32>
    %c5 = arith.constant 5 : index
    %c0_20 = arith.constant 0 : index
    %c0_21 = arith.constant 0 : index
    %36 = vector.load %arg1[%c5, %c0_20, %c0_21] : memref<9x1x512xf32, #tpu.memory_space<vmem>>, vector<1x1x512xf32>
    %37 = vector.shape_cast %36 : vector<1x1x512xf32> to vector<1x512xf32>
    %38 = vector.broadcast %37 : vector<1x512xf32> to vector<16x512xf32>
    %39 = arith.mulf %35, %38 : vector<16x512xf32>
    %40 = arith.truncf %39 : vector<16x512xf32> to vector<16x512xbf16>
    %c80 = arith.constant 80 : index
    %c0_22 = arith.constant 0 : index
    %41 = vector.load %arg8[%c80, %c0_22] : memref<144x512xbf16, #tpu.memory_space<vmem>>, vector<16x512xbf16>
    tpu.vector_store %arg8[%c80, %c0_22], %40 {strides = array<i32>} : memref<144x512xbf16, #tpu.memory_space<vmem>>, vector<16x512xbf16>,
    %c497_i32 = arith.constant 497 : i32
    %42 = tpu.dynamic_rotate %4 by %c497_i32 dim 1 : vector<16x512xf32>, i32 -> vector<16x512xf32>
    %c6 = arith.constant 6 : index
    %c0_23 = arith.constant 0 : index
    %c0_24 = arith.constant 0 : index
    %43 = vector.load %arg1[%c6, %c0_23, %c0_24] : memref<9x1x512xf32, #tpu.memory_space<vmem>>, vector<1x1x512xf32>
    %44 = vector.shape_cast %43 : vector<1x1x512xf32> to vector<1x512xf32>
    %45 = vector.broadcast %44 : vector<1x512xf32> to vector<16x512xf32>
    %46 = arith.mulf %42, %45 : vector<16x512xf32>
    %47 = arith.truncf %46 : vector<16x512xf32> to vector<16x512xbf16>
    %c96 = arith.constant 96 : index
    %c0_25 = arith.constant 0 : index
    %48 = vector.load %arg8[%c96, %c0_25] : memref<144x512xbf16, #tpu.memory_space<vmem>>, vector<16x512xbf16>
    tpu.vector_store %arg8[%c96, %c0_25], %47 {strides = array<i32>} : memref<144x512xbf16, #tpu.memory_space<vmem>>, vector<16x512xbf16>,
    %c496_i32 = arith.constant 496 : i32
    %49 = tpu.dynamic_rotate %4 by %c496_i32 dim 1 : vector<16x512xf32>, i32 -> vector<16x512xf32>
    %c7 = arith.constant 7 : index
    %c0_26 = arith.constant 0 : index
    %c0_27 = arith.constant 0 : index
    %50 = vector.load %arg1[%c7, %c0_26, %c0_27] : memref<9x1x512xf32, #tpu.memory_space<vmem>>, vector<1x1x512xf32>
    %51 = vector.shape_cast %50 : vector<1x1x512xf32> to vector<1x512xf32>
    %52 = vector.broadcast %51 : vector<1x512xf32> to vector<16x512xf32>
    %53 = arith.mulf %49, %52 : vector<16x512xf32>
    %54 = arith.truncf %53 : vector<16x512xf32> to vector<16x512xbf16>
    %c112 = arith.constant 112 : index
    %c0_28 = arith.constant 0 : index
    %55 = vector.load %arg8[%c112, %c0_28] : memref<144x512xbf16, #tpu.memory_space<vmem>>, vector<16x512xbf16>
    tpu.vector_store %arg8[%c112, %c0_28], %54 {strides = array<i32>} : memref<144x512xbf16, #tpu.memory_space<vmem>>, vector<16x512xbf16>,
    %c495_i32 = arith.constant 495 : i32
    %56 = tpu.dynamic_rotate %4 by %c495_i32 dim 1 : vector<16x512xf32>, i32 -> vector<16x512xf32>
    %c8 = arith.constant 8 : index
    %c0_29 = arith.constant 0 : index
    %c0_30 = arith.constant 0 : index
    %57 = vector.load %arg1[%c8, %c0_29, %c0_30] : memref<9x1x512xf32, #tpu.memory_space<vmem>>, vector<1x1x512xf32>
    %58 = vector.shape_cast %57 : vector<1x1x512xf32> to vector<1x512xf32>
    %59 = vector.broadcast %58 : vector<1x512xf32> to vector<16x512xf32>
    %60 = arith.mulf %56, %59 : vector<16x512xf32>
    %61 = arith.truncf %60 : vector<16x512xf32> to vector<16x512xbf16>
    %c128 = arith.constant 128 : index
    %c0_31 = arith.constant 0 : index
    %62 = vector.load %arg8[%c128, %c0_31] : memref<144x512xbf16, #tpu.memory_space<vmem>>, vector<16x512xbf16>
    tpu.vector_store %arg8[%c128, %c0_31], %61 {strides = array<i32>} : memref<144x512xbf16, #tpu.memory_space<vmem>>, vector<16x512xbf16>,
    %c0_32 = arith.constant 0 : index
    %c0_33 = arith.constant 0 : index
    %63 = vector.load %arg3[%c0_32, %c0_33] : memref<16x144xbf16, #tpu.memory_space<vmem>>, vector<16x144xbf16>
    %c0_34 = arith.constant 0 : index
    %c0_35 = arith.constant 0 : index
    %64 = vector.load %arg8[%c0_34, %c0_35] : memref<144x512xbf16, #tpu.memory_space<vmem>>, vector<144x512xbf16>
    %cst = arith.constant dense<0.000000e+00> : vector<16x512xf32>
    %65 = tpu.matmul %63, %64, %cst {dimension_numbers = #tpu.dot_dimension_numbers<[1], [0], [0], [1], [0, 0, 1, 1], [], []>} : vector<16x144xbf16>, vector<144x512xbf16>, vector<16x512xf32> -> vector<16x512xf32>
    %c0_36 = arith.constant 0 : index
    %c0_37 = arith.constant 0 : index
    %66 = vector.load %arg4[%c0_36, %c0_37] : memref<16x1xf32, #tpu.memory_space<vmem>>, vector<16x1xf32>
    %67 = vector.broadcast %66 : vector<16x1xf32> to vector<16x512xf32>
    %68 = arith.addf %65, %67 : vector<16x512xf32>
    %cst_38 = arith.constant 0.000000e+00 : f32
    %69 = vector.broadcast %cst_38 : f32 to vector<16x512xf32>
    %70 = arith.maximumf %68, %69 : vector<16x512xf32>
    %c17_i32_39 = arith.constant 17 : i32
    %71 = tpu.dynamic_rotate %70 by %c17_i32_39 dim 1 : vector<16x512xf32>, i32 -> vector<16x512xf32>
    %c0_40 = arith.constant 0 : index
    %c0_41 = arith.constant 0 : index
    %c0_42 = arith.constant 0 : index
    %72 = vector.load %arg1[%c0_40, %c0_41, %c0_42] : memref<9x1x512xf32, #tpu.memory_space<vmem>>, vector<1x1x512xf32>
    %73 = vector.shape_cast %72 : vector<1x1x512xf32> to vector<1x512xf32>
    %74 = vector.broadcast %73 : vector<1x512xf32> to vector<16x512xf32>
    %75 = arith.mulf %71, %74 : vector<16x512xf32>
    %76 = arith.truncf %75 : vector<16x512xf32> to vector<16x512xbf16>
    %c0_43 = arith.constant 0 : index
    %c0_44 = arith.constant 0 : index
    %77 = vector.load %arg8[%c0_43, %c0_44] : memref<144x512xbf16, #tpu.memory_space<vmem>>, vector<16x512xbf16>
    tpu.vector_store %arg8[%c0_43, %c0_44], %76 {strides = array<i32>} : memref<144x512xbf16, #tpu.memory_space<vmem>>, vector<16x512xbf16>,
    %c16_i32_45 = arith.constant 16 : i32
    %78 = tpu.dynamic_rotate %70 by %c16_i32_45 dim 1 : vector<16x512xf32>, i32 -> vector<16x512xf32>
    %c1_46 = arith.constant 1 : index
    %c0_47 = arith.constant 0 : index
    %c0_48 = arith.constant 0 : index
    %79 = vector.load %arg1[%c1_46, %c0_47, %c0_48] : memref<9x1x512xf32, #tpu.memory_space<vmem>>, vector<1x1x512xf32>
    %80 = vector.shape_cast %79 : vector<1x1x512xf32> to vector<1x512xf32>
    %81 = vector.broadcast %80 : vector<1x512xf32> to vector<16x512xf32>
    %82 = arith.mulf %78, %81 : vector<16x512xf32>
    %83 = arith.truncf %82 : vector<16x512xf32> to vector<16x512xbf16>
    %c16_49 = arith.constant 16 : index
    %c0_50 = arith.constant 0 : index
    %84 = vector.load %arg8[%c16_49, %c0_50] : memref<144x512xbf16, #tpu.memory_space<vmem>>, vector<16x512xbf16>
    tpu.vector_store %arg8[%c16_49, %c0_50], %83 {strides = array<i32>} : memref<144x512xbf16, #tpu.memory_space<vmem>>, vector<16x512xbf16>,
    %c15_i32_51 = arith.constant 15 : i32
    %85 = tpu.dynamic_rotate %70 by %c15_i32_51 dim 1 : vector<16x512xf32>, i32 -> vector<16x512xf32>
    %c2_52 = arith.constant 2 : index
    %c0_53 = arith.constant 0 : index
    %c0_54 = arith.constant 0 : index
    %86 = vector.load %arg1[%c2_52, %c0_53, %c0_54] : memref<9x1x512xf32, #tpu.memory_space<vmem>>, vector<1x1x512xf32>
    %87 = vector.shape_cast %86 : vector<1x1x512xf32> to vector<1x512xf32>
    %88 = vector.broadcast %87 : vector<1x512xf32> to vector<16x512xf32>
    %89 = arith.mulf %85, %88 : vector<16x512xf32>
    %90 = arith.truncf %89 : vector<16x512xf32> to vector<16x512xbf16>
    %c32_55 = arith.constant 32 : index
    %c0_56 = arith.constant 0 : index
    %91 = vector.load %arg8[%c32_55, %c0_56] : memref<144x512xbf16, #tpu.memory_space<vmem>>, vector<16x512xbf16>
    tpu.vector_store %arg8[%c32_55, %c0_56], %90 {strides = array<i32>} : memref<144x512xbf16, #tpu.memory_space<vmem>>, vector<16x512xbf16>,
    %c1_i32_57 = arith.constant 1 : i32
    %92 = tpu.dynamic_rotate %70 by %c1_i32_57 dim 1 : vector<16x512xf32>, i32 -> vector<16x512xf32>
    %c3_58 = arith.constant 3 : index
    %c0_59 = arith.constant 0 : index
    %c0_60 = arith.constant 0 : index
    %93 = vector.load %arg1[%c3_58, %c0_59, %c0_60] : memref<9x1x512xf32, #tpu.memory_space<vmem>>, vector<1x1x512xf32>
    %94 = vector.shape_cast %93 : vector<1x1x512xf32> to vector<1x512xf32>
    %95 = vector.broadcast %94 : vector<1x512xf32> to vector<16x512xf32>
    %96 = arith.mulf %92, %95 : vector<16x512xf32>
    %97 = arith.truncf %96 : vector<16x512xf32> to vector<16x512xbf16>
    %c48_61 = arith.constant 48 : index
    %c0_62 = arith.constant 0 : index
    %98 = vector.load %arg8[%c48_61, %c0_62] : memref<144x512xbf16, #tpu.memory_space<vmem>>, vector<16x512xbf16>
    tpu.vector_store %arg8[%c48_61, %c0_62], %97 {strides = array<i32>} : memref<144x512xbf16, #tpu.memory_space<vmem>>, vector<16x512xbf16>,
    %99 = arith.truncf %70 : vector<16x512xf32> to vector<16x512xbf16>
    %c64_63 = arith.constant 64 : index
    %c0_64 = arith.constant 0 : index
    %100 = vector.load %arg8[%c64_63, %c0_64] : memref<144x512xbf16, #tpu.memory_space<vmem>>, vector<16x512xbf16>
    tpu.vector_store %arg8[%c64_63, %c0_64], %99 {strides = array<i32>} : memref<144x512xbf16, #tpu.memory_space<vmem>>, vector<16x512xbf16>,
    %c511_i32_65 = arith.constant 511 : i32
    %101 = tpu.dynamic_rotate %70 by %c511_i32_65 dim 1 : vector<16x512xf32>, i32 -> vector<16x512xf32>
    %c5_66 = arith.constant 5 : index
    %c0_67 = arith.constant 0 : index
    %c0_68 = arith.constant 0 : index
    %102 = vector.load %arg1[%c5_66, %c0_67, %c0_68] : memref<9x1x512xf32, #tpu.memory_space<vmem>>, vector<1x1x512xf32>
    %103 = vector.shape_cast %102 : vector<1x1x512xf32> to vector<1x512xf32>
    %104 = vector.broadcast %103 : vector<1x512xf32> to vector<16x512xf32>
    %105 = arith.mulf %101, %104 : vector<16x512xf32>
    %106 = arith.truncf %105 : vector<16x512xf32> to vector<16x512xbf16>
    %c80_69 = arith.constant 80 : index
    %c0_70 = arith.constant 0 : index
    %107 = vector.load %arg8[%c80_69, %c0_70] : memref<144x512xbf16, #tpu.memory_space<vmem>>, vector<16x512xbf16>
    tpu.vector_store %arg8[%c80_69, %c0_70], %106 {strides = array<i32>} : memref<144x512xbf16, #tpu.memory_space<vmem>>, vector<16x512xbf16>,
    %c497_i32_71 = arith.constant 497 : i32
    %108 = tpu.dynamic_rotate %70 by %c497_i32_71 dim 1 : vector<16x512xf32>, i32 -> vector<16x512xf32>
    %c6_72 = arith.constant 6 : index
    %c0_73 = arith.constant 0 : index
    %c0_74 = arith.constant 0 : index
    %109 = vector.load %arg1[%c6_72, %c0_73, %c0_74] : memref<9x1x512xf32, #tpu.memory_space<vmem>>, vector<1x1x512xf32>
    %110 = vector.shape_cast %109 : vector<1x1x512xf32> to vector<1x512xf32>
    %111 = vector.broadcast %110 : vector<1x512xf32> to vector<16x512xf32>
    %112 = arith.mulf %108, %111 : vector<16x512xf32>
    %113 = arith.truncf %112 : vector<16x512xf32> to vector<16x512xbf16>
    %c96_75 = arith.constant 96 : index
    %c0_76 = arith.constant 0 : index
    %114 = vector.load %arg8[%c96_75, %c0_76] : memref<144x512xbf16, #tpu.memory_space<vmem>>, vector<16x512xbf16>
    tpu.vector_store %arg8[%c96_75, %c0_76], %113 {strides = array<i32>} : memref<144x512xbf16, #tpu.memory_space<vmem>>, vector<16x512xbf16>,
    %c496_i32_77 = arith.constant 496 : i32
    %115 = tpu.dynamic_rotate %70 by %c496_i32_77 dim 1 : vector<16x512xf32>, i32 -> vector<16x512xf32>
    %c7_78 = arith.constant 7 : index
    %c0_79 = arith.constant 0 : index
    %c0_80 = arith.constant 0 : index
    %116 = vector.load %arg1[%c7_78, %c0_79, %c0_80] : memref<9x1x512xf32, #tpu.memory_space<vmem>>, vector<1x1x512xf32>
    %117 = vector.shape_cast %116 : vector<1x1x512xf32> to vector<1x512xf32>
    %118 = vector.broadcast %117 : vector<1x512xf32> to vector<16x512xf32>
    %119 = arith.mulf %115, %118 : vector<16x512xf32>
    %120 = arith.truncf %119 : vector<16x512xf32> to vector<16x512xbf16>
    %c112_81 = arith.constant 112 : index
    %c0_82 = arith.constant 0 : index
    %121 = vector.load %arg8[%c112_81, %c0_82] : memref<144x512xbf16, #tpu.memory_space<vmem>>, vector<16x512xbf16>
    tpu.vector_store %arg8[%c112_81, %c0_82], %120 {strides = array<i32>} : memref<144x512xbf16, #tpu.memory_space<vmem>>, vector<16x512xbf16>,
    %c495_i32_83 = arith.constant 495 : i32
    %122 = tpu.dynamic_rotate %70 by %c495_i32_83 dim 1 : vector<16x512xf32>, i32 -> vector<16x512xf32>
    %c8_84 = arith.constant 8 : index
    %c0_85 = arith.constant 0 : index
    %c0_86 = arith.constant 0 : index
    %123 = vector.load %arg1[%c8_84, %c0_85, %c0_86] : memref<9x1x512xf32, #tpu.memory_space<vmem>>, vector<1x1x512xf32>
    %124 = vector.shape_cast %123 : vector<1x1x512xf32> to vector<1x512xf32>
    %125 = vector.broadcast %124 : vector<1x512xf32> to vector<16x512xf32>
    %126 = arith.mulf %122, %125 : vector<16x512xf32>
    %127 = arith.truncf %126 : vector<16x512xf32> to vector<16x512xbf16>
    %c128_87 = arith.constant 128 : index
    %c0_88 = arith.constant 0 : index
    %128 = vector.load %arg8[%c128_87, %c0_88] : memref<144x512xbf16, #tpu.memory_space<vmem>>, vector<16x512xbf16>
    tpu.vector_store %arg8[%c128_87, %c0_88], %127 {strides = array<i32>} : memref<144x512xbf16, #tpu.memory_space<vmem>>, vector<16x512xbf16>,
    %c0_89 = arith.constant 0 : index
    %c0_90 = arith.constant 0 : index
    %129 = vector.load %arg5[%c0_89, %c0_90] : memref<16x144xbf16, #tpu.memory_space<vmem>>, vector<16x144xbf16>
    %c0_91 = arith.constant 0 : index
    %c0_92 = arith.constant 0 : index
    %130 = vector.load %arg8[%c0_91, %c0_92] : memref<144x512xbf16, #tpu.memory_space<vmem>>, vector<144x512xbf16>
    %cst_93 = arith.constant dense<0.000000e+00> : vector<16x512xf32>
    %131 = tpu.matmul %129, %130, %cst_93 {dimension_numbers = #tpu.dot_dimension_numbers<[1], [0], [0], [1], [0, 0, 1, 1], [], []>} : vector<16x144xbf16>, vector<144x512xbf16>, vector<16x512xf32> -> vector<16x512xf32>
    %c0_94 = arith.constant 0 : index
    %c0_95 = arith.constant 0 : index
    %132 = vector.load %arg6[%c0_94, %c0_95] : memref<16x1xf32, #tpu.memory_space<vmem>>, vector<16x1xf32>
    %133 = vector.broadcast %132 : vector<16x1xf32> to vector<16x512xf32>
    %134 = arith.addf %131, %133 : vector<16x512xf32>
    %cst_96 = arith.constant 0.000000e+00 : f32
    %135 = vector.broadcast %cst_96 : f32 to vector<16x512xf32>
    %136 = arith.maximumf %134, %135 : vector<16x512xf32>
    %137 = vector.extract_strided_slice %136 {offsets = [0, 0], sizes = [8, 256], strides = [1, 1]} : vector<16x512xf32> to vector<8x256xf32>
    %c0_97 = arith.constant 0 : index
    %c0_98 = arith.constant 0 : index
    %c0_99 = arith.constant 0 : index
    %138 = vector.load %arg7[%c0_97, %c0_98, %c0_99] : memref<2x8x256xf32, #tpu.memory_space<vmem>>, vector<1x8x256xf32>
    %139 = vector.shape_cast %138 : vector<1x8x256xf32> to vector<8x256xf32>
    %140 = vector.shape_cast %137 : vector<8x256xf32> to vector<1x8x256xf32>
    tpu.vector_store %arg7[%c0_97, %c0_98, %c0_99], %140 {strides = array<i32>} : memref<2x8x256xf32, #tpu.memory_space<vmem>>, vector<1x8x256xf32>,
    %141 = vector.extract_strided_slice %136 {offsets = [0, 256], sizes = [8, 256], strides = [1, 1]} : vector<16x512xf32> to vector<8x256xf32>
    %c1_100 = arith.constant 1 : index
    %c0_101 = arith.constant 0 : index
    %c0_102 = arith.constant 0 : index
    %142 = vector.load %arg7[%c1_100, %c0_101, %c0_102] : memref<2x8x256xf32, #tpu.memory_space<vmem>>, vector<1x8x256xf32>
    %143 = vector.shape_cast %142 : vector<1x8x256xf32> to vector<8x256xf32>
    %144 = vector.shape_cast %141 : vector<8x256xf32> to vector<1x8x256xf32>
    tpu.vector_store %arg7[%c1_100, %c0_101, %c0_102], %144 {strides = array<i32>} : memref<2x8x256xf32, #tpu.memory_space<vmem>>, vector<1x8x256xf32>,
    return
  }
  func.func @transform_0(%arg0: i32) -> (i32, i32, i32) {
    %c0_i32 = arith.constant 0 : i32
    %c0_i32_0 = arith.constant 0 : i32
    %c0_i32_1 = arith.constant 0 : i32
    %c0_i32_2 = arith.constant 0 : i32
    return %c0_i32, %c0_i32_0, %c0_i32_1 : i32, i32, i32
  }
  func.func @transform_1(%arg0: i32) -> (i32, i32, i32) {
    %c0_i32 = arith.constant 0 : i32
    %c0_i32_0 = arith.constant 0 : i32
    %c0_i32_1 = arith.constant 0 : i32
    %c0_i32_2 = arith.constant 0 : i32
    return %c0_i32, %c0_i32_0, %c0_i32_1 : i32, i32, i32
  }
  func.func @transform_2(%arg0: i32) -> (i32, i32) {
    %c0_i32 = arith.constant 0 : i32
    %c0_i32_0 = arith.constant 0 : i32
    %c0_i32_1 = arith.constant 0 : i32
    return %c0_i32, %c0_i32_0 : i32, i32
  }
  func.func @transform_3(%arg0: i32) -> (i32, i32) {
    %c0_i32 = arith.constant 0 : i32
    %c0_i32_0 = arith.constant 0 : i32
    %c0_i32_1 = arith.constant 0 : i32
    return %c0_i32, %c0_i32_0 : i32, i32
  }
  func.func @transform_4(%arg0: i32) -> (i32, i32) {
    %c0_i32 = arith.constant 0 : i32
    %c0_i32_0 = arith.constant 0 : i32
    %c0_i32_1 = arith.constant 0 : i32
    return %c0_i32, %c0_i32_0 : i32, i32
  }
  func.func @transform_5(%arg0: i32) -> (i32, i32) {
    %c0_i32 = arith.constant 0 : i32
    %c0_i32_0 = arith.constant 0 : i32
    %c0_i32_1 = arith.constant 0 : i32
    return %c0_i32, %c0_i32_0 : i32, i32
  }
  func.func @transform_6(%arg0: i32) -> (i32, i32, i32) {
    %c0_i32 = arith.constant 0 : i32
    %c0_i32_0 = arith.constant 0 : i32
    %c0_i32_1 = arith.constant 0 : i32
    %c0_i32_2 = arith.constant 0 : i32
    return %c0_i32, %c0_i32_0, %c0_i32_1 : i32, i32, i32
  }
}

</mosaic_0001>

<llo_original>
// kernel: tpu_custom_call.1
$region0: #{tpu_custom_call.1}
  #allocation0 [shape = 'u32[]', space=smem, size = 0x4, offset = 0x4, fixed_abs, tag = 'smem constant byte address 0x4 - core index']
  #allocation1 [shape = 'u32[72,128]{1,0:T(1,128)}', space=vmem, size = 0x9000, scoped, tag = 'internal scratch']
  #allocation2 [shape = 'bf16[144,512]{1,0:T(8,128)(2,1)}', space=vmem, size = 0x24000, scoped, tag = 'scratch operand']
  %s0 = inlined_call_operand.hbm [shape: f32[9,1,512], index: 0, kind: input, shape index: {}]
  %s1 = inlined_call_operand.hbm [shape: f32[2,16,256], index: 1, kind: input, shape index: {}]
  %s2 = inlined_call_operand.vmem [shape: bf16[16,144], index: 2, kind: input, shape index: {}]
  %s3 = inlined_call_operand.vmem [shape: f32[16,1], index: 3, kind: input, shape index: {}]
  %s4 = inlined_call_operand.vmem [shape: bf16[16,144], index: 4, kind: input, shape index: {}]
  %s5 = inlined_call_operand.vmem [shape: f32[16,1], index: 5, kind: input, shape index: {}]
  %s6 = inlined_call_operand.hbm [shape: f32[2,8,256], index: 6, kind: output, shape index: {}]
  %s7 = sld [smem:[#allocation0]]
  $region42: #{tpu_custom_call.1} parent=0
    _
  %s9 = ssub.s32 1, %s7
  %s10 = scalar_select 0, %s9, %s7
  $region1: #{tpu_custom_call.1} parent=0
    #allocation3 [shape = 'u8[18432]{0}', space=vmem, size = 0x4800, scoped, tag = 'input window, operand 0, single buffered']
    #allocation4 [shape = 's32[1]{0}', space=sflag, size = 0x4, scoped, tag = 'scoped memory for tpu_custom_call.1']
    #allocation5 [shape = 's32[1]{0}', space=sflag, size = 0x4, scoped, tag = 'scoped memory for tpu_custom_call.1']
    #allocation6 [shape = 'u8[32768]{0}', space=vmem, size = 0x8000, scoped, tag = 'input window, operand 1, single buffered']
    #allocation7 [shape = 's32[1]{0}', space=sflag, size = 0x4, scoped, tag = 'scoped memory for tpu_custom_call.1']
    #allocation8 [shape = 'u8[16384]{0}', space=vmem, size = 0x4000, scoped, tag = 'output window, operand 0, single buffered']
    %11 = vsyncpa [#allocation4], 0
    %12 = vsyncpa [#allocation7], 0
    %13 = vsyncpa [#allocation5], 0
    // Predicated region
    $region2: #{tpu_custom_call.1} parent=1 // pred_check
      _
    $region3: #{tpu_custom_call.1} parent=1 // pred_check_branch
      %15 = sbr.rel (0) target = $region5
    $region4: #{tpu_custom_call.1} parent=1 // pred_region
      %17 = vsyncadd [#allocation4], 0
      %s18 = sshll.u32 %s0, 4
      %s19 = int_to_ptr.hbm [resolvable:$true] %s18
      %s20 = sshll.u32 [#allocation3], 4
      %s21 = int_to_ptr.vmem [resolvable:$true] %s20
      %26 = dma.hbm_to_vmem [thread:$0]  %s19, 576, %s21, [#allocation4], 64, 64, 4
    $region5: #{tpu_custom_call.1} parent=1 // pred_fallthru
      _
    // Predicated region
    $region6: #{tpu_custom_call.1} parent=1 // pred_check
      _
    $region7: #{tpu_custom_call.1} parent=1 // pred_check_branch
      %28 = sbr.rel (0) target = $region9
    $region8: #{tpu_custom_call.1} parent=1 // pred_region
      %30 = vsyncadd [#allocation7], 0
      %s31 = sshll.u32 %s1, 4
      %s32 = int_to_ptr.hbm [resolvable:$true] %s31
      %s33 = sshll.u32 [#allocation6], 4
      %s34 = int_to_ptr.vmem [resolvable:$true] %s33
      %39 = dma.hbm_to_vmem [thread:$0]  %s32, 1024, %s34, [#allocation7], 256, 256, 16
    $region9: #{tpu_custom_call.1} parent=1 // pred_fallthru
      _
    // Predicated region
    $region10: #{tpu_custom_call.1} parent=1 // pred_check
      _
    $region11: #{tpu_custom_call.1} parent=1 // pred_check_branch
      %41 = sbr.rel (0) target = $region13
    $region12: #{tpu_custom_call.1} parent=1 // pred_region
      _
    $region13: #{tpu_custom_call.1} parent=1 // pred_fallthru
      _
    // Predicated region
    $region14: #{tpu_custom_call.1} parent=1 // pred_check
      _
    $region15: #{tpu_custom_call.1} parent=1 // pred_check_branch
      %43 = sbr.rel (0) target = $region17
    $region16: #{tpu_custom_call.1} parent=1 // pred_region
      _
    $region17: #{tpu_custom_call.1} parent=1 // pred_fallthru
      _
    // Predicated region
    $region18: #{tpu_custom_call.1} parent=1 // pred_check
      _
    $region19: #{tpu_custom_call.1} parent=1 // pred_check_branch
      %45 = sbr.rel (0) target = $region21
    $region20: #{tpu_custom_call.1} parent=1 // pred_region
      _
    $region21: #{tpu_custom_call.1} parent=1 // pred_fallthru
      _
    // Predicated region
    $region22: #{tpu_custom_call.1} parent=1 // pred_check
      _
    $region23: #{tpu_custom_call.1} parent=1 // pred_check_branch
      %47 = sbr.rel (0) target = $region25
    $region24: #{tpu_custom_call.1} parent=1 // pred_region
      _
    $region25: #{tpu_custom_call.1} parent=1 // pred_fallthru
      _
    // Predicated region
    $region26: #{tpu_custom_call.1} parent=1 // pred_check
      _
    $region27: #{tpu_custom_call.1} parent=1 // pred_check_branch
      %49 = sbr.rel (0) target = $region29
    $region28: #{tpu_custom_call.1} parent=1 // pred_region
      %51 = dma.done [#allocation4], 576
    $region29: #{tpu_custom_call.1} parent=1 // pred_fallthru
      _
    // Predicated region
    $region30: #{tpu_custom_call.1} parent=1 // pred_check
      _
    $region31: #{tpu_custom_call.1} parent=1 // pred_check_branch
      %53 = sbr.rel (0) target = $region33
    $region32: #{tpu_custom_call.1} parent=1 // pred_region
      %55 = dma.done [#allocation7], 1024
    $region33: #{tpu_custom_call.1} parent=1 // pred_fallthru
      _
    %v57 = vld [vmem:[#allocation6] sm:$0xff]
    %v58 = vld [vmem:[#allocation6 + $0x8] sm:$0xff]
    %v59 = vld [vmem:[#allocation6 + $0x10] sm:$0xff]
    %v60 = vld [vmem:[#allocation6 + $0x18] sm:$0xff]
    %s61 = scalar_lea.vmem [#allocation6], 32
    %v62 = vld [vmem:[%s61] sm:$0xff]
    %v63 = vld [vmem:[%s61 + $0x8] sm:$0xff]
    %v64 = vld [vmem:[%s61 + $0x10] sm:$0xff]
    %v65 = vld [vmem:[%s61 + $0x18] sm:$0xff]
    %66 = vrot.lane.b32.xlu0 %v57, 17
    %v67 = vpop.permute.xlu0 %66
    %68 = vrot.lane.b32.xlu0 %v59, 17
    %v69 = vpop.permute.xlu0 %68
    %70 = vrot.lane.b32.xlu0 %v58, 17
    %v71 = vpop.permute.xlu0 %70
    %72 = vrot.lane.b32.xlu0 %v60, 17
    %v73 = vpop.permute.xlu0 %72
    %74 = vrot.lane.b32.xlu0 %v62, 17
    %v75 = vpop.permute.xlu0 %74
    %76 = vrot.lane.b32.xlu0 %v64, 17
    %v77 = vpop.permute.xlu0 %76
    %78 = vrot.lane.b32.xlu0 %v63, 17
    %v79 = vpop.permute.xlu0 %78
    %80 = vrot.lane.b32.xlu0 %v65, 17
    %v81 = vpop.permute.xlu0 %80
    %v82 = vlaneseq
    %v83 = vand.u32 %v82, 127
    %vm84 = vcmp.lt.s32.totalorder %v83, 17
    %v85 = vsel %vm84, %v75, %v79
    %v86 = vsel %vm84, %v77, %v81
    %v87 = vsel %vm84, %v71, %v75
    %v88 = vsel %vm84, %v73, %v77
    %v89 = vsel %vm84, %v67, %v71
    %v90 = vsel %vm84, %v69, %v73
    %v91 = vsel %vm84, %v79, %v67
    %v92 = vsel %vm84, %v81, %v69
    %v93 = vld [vmem:[#allocation3] sm:$0xf]
    %v95 = vperm.slane %v93, 0
    %v96 = vperm.slane %v93, 1
    %v97 = vperm.slane %v93, 2
    %v98 = vperm.slane %v93, 3
    %v103 = vmul.f32 %v91, %v95
    %v104 = vmul.f32 %v89, %v96
    %v105 = vmul.f32 %v87, %v97
    %v106 = vmul.f32 %v85, %v98
    %v107 = vmul.f32 %v92, %v95
    %v108 = vmul.f32 %v90, %v96
    %v109 = vmul.f32 %v88, %v97
    %v110 = vmul.f32 %v86, %v98
    %v111 = vpack.c.bf16 %v104, %v103
    %v112 = vpack.c.bf16 %v106, %v105
    %v113 = vpack.c.bf16 %v108, %v107
    %v114 = vpack.c.bf16 %v110, %v109
    %115 = vst [vmem:[#allocation2] sm:$0xff] %v111
    %116 = vst [vmem:[#allocation2 + $0x8] sm:$0xff] %v112
    %117 = vst [vmem:[#allocation2 + $0x10] sm:$0xff] %v113
    %118 = vst [vmem:[#allocation2 + $0x18] sm:$0xff] %v114
    %119 = vrot.lane.b32.xlu0 %v57, 16
    %v120 = vpop.permute.xlu0 %119
    %121 = vrot.lane.b32.xlu0 %v59, 16
    %v122 = vpop.permute.xlu0 %121
    %123 = vrot.lane.b32.xlu0 %v58, 16
    %v124 = vpop.permute.xlu0 %123
    %125 = vrot.lane.b32.xlu0 %v60, 16
    %v126 = vpop.permute.xlu0 %125
    %127 = vrot.lane.b32.xlu0 %v62, 16
    %v128 = vpop.permute.xlu0 %127
    %129 = vrot.lane.b32.xlu0 %v64, 16
    %v130 = vpop.permute.xlu0 %129
    %131 = vrot.lane.b32.xlu0 %v63, 16
    %v132 = vpop.permute.xlu0 %131
    %133 = vrot.lane.b32.xlu0 %v65, 16
    %v134 = vpop.permute.xlu0 %133
    %vm135 = vcmp.lt.s32.totalorder %v83, 16
    %v136 = vsel %vm135, %v128, %v132
    %v137 = vsel %vm135, %v130, %v134
    %v138 = vsel %vm135, %v124, %v128
    %v139 = vsel %vm135, %v126, %v130
    %v140 = vsel %vm135, %v120, %v124
    %v141 = vsel %vm135, %v122, %v126
    %v142 = vsel %vm135, %v132, %v120
    %v143 = vsel %vm135, %v134, %v122
    %s144 = scalar_lea.vmem [#allocation3], 4
    %v145 = vld [vmem:[%s144] sm:$0xf]
    %v147 = vperm.slane %v145, 0
    %v148 = vperm.slane %v145, 1
    %v149 = vperm.slane %v145, 2
    %v150 = vperm.slane %v145, 3
    %v155 = vmul.f32 %v142, %v147
    %v156 = vmul.f32 %v140, %v148
    %v157 = vmul.f32 %v138, %v149
    %v158 = vmul.f32 %v136, %v150
    %v159 = vmul.f32 %v143, %v147
    %v160 = vmul.f32 %v141, %v148
    %v161 = vmul.f32 %v139, %v149
    %v162 = vmul.f32 %v137, %v150
    %v163 = vpack.c.bf16 %v156, %v155
    %v164 = vpack.c.bf16 %v158, %v157
    %v165 = vpack.c.bf16 %v160, %v159
    %v166 = vpack.c.bf16 %v162, %v161
    %167 = vst [vmem:[#allocation2 + $0x20] sm:$0xff] %v163
    %168 = vst [vmem:[#allocation2 + $0x28] sm:$0xff] %v164
    %169 = vst [vmem:[#allocation2 + $0x30] sm:$0xff] %v165
    %170 = vst [vmem:[#allocation2 + $0x38] sm:$0xff] %v166
    %171 = vrot.lane.b32.xlu0 %v57, 15
    %v172 = vpop.permute.xlu0 %171
    %173 = vrot.lane.b32.xlu0 %v59, 15
    %v174 = vpop.permute.xlu0 %173
    %175 = vrot.lane.b32.xlu0 %v58, 15
    %v176 = vpop.permute.xlu0 %175
    %177 = vrot.lane.b32.xlu0 %v60, 15
    %v178 = vpop.permute.xlu0 %177
    %179 = vrot.lane.b32.xlu0 %v62, 15
    %v180 = vpop.permute.xlu0 %179
    %181 = vrot.lane.b32.xlu0 %v64, 15
    %v182 = vpop.permute.xlu0 %181
    %183 = vrot.lane.b32.xlu0 %v63, 15
    %v184 = vpop.permute.xlu0 %183
    %185 = vrot.lane.b32.xlu0 %v65, 15
    %v186 = vpop.permute.xlu0 %185
    %vm187 = vcmp.lt.s32.totalorder %v83, 15
    %v188 = vsel %vm187, %v180, %v184
    %v189 = vsel %vm187, %v182, %v186
    %v190 = vsel %vm187, %v176, %v180
    %v191 = vsel %vm187, %v178, %v182
    %v192 = vsel %vm187, %v172, %v176
    %v193 = vsel %vm187, %v174, %v178
    %v194 = vsel %vm187, %v184, %v172
    %v195 = vsel %vm187, %v186, %v174
    %s196 = scalar_lea.vmem [#allocation3], 8
    %v197 = vld [vmem:[%s196] sm:$0xf]
    %v199 = vperm.slane %v197, 0
    %v200 = vperm.slane %v197, 1
    %v201 = vperm.slane %v197, 2
    %v202 = vperm.slane %v197, 3
    %v207 = vmul.f32 %v194, %v199
    %v208 = vmul.f32 %v192, %v200
    %v209 = vmul.f32 %v190, %v201
    %v210 = vmul.f32 %v188, %v202
    %v211 = vmul.f32 %v195, %v199
    %v212 = vmul.f32 %v193, %v200
    %v213 = vmul.f32 %v191, %v201
    %v214 = vmul.f32 %v189, %v202
    %v215 = vpack.c.bf16 %v208, %v207
    %v216 = vpack.c.bf16 %v210, %v209
    %v217 = vpack.c.bf16 %v212, %v211
    %v218 = vpack.c.bf16 %v214, %v213
    %219 = vst [vmem:[#allocation2 + $0x40] sm:$0xff] %v215
    %220 = vst [vmem:[#allocation2 + $0x48] sm:$0xff] %v216
    %221 = vst [vmem:[#allocation2 + $0x50] sm:$0xff] %v217
    %222 = vst [vmem:[#allocation2 + $0x58] sm:$0xff] %v218
    %223 = vrot.lane.b32.xlu0 %v57, 1
    %v224 = vpop.permute.xlu0 %223
    %225 = vrot.lane.b32.xlu0 %v59, 1
    %v226 = vpop.permute.xlu0 %225
    %227 = vrot.lane.b32.xlu0 %v58, 1
    %v228 = vpop.permute.xlu0 %227
    %229 = vrot.lane.b32.xlu0 %v60, 1
    %v230 = vpop.permute.xlu0 %229
    %231 = vrot.lane.b32.xlu0 %v62, 1
    %v232 = vpop.permute.xlu0 %231
    %233 = vrot.lane.b32.xlu0 %v64, 1
    %v234 = vpop.permute.xlu0 %233
    %235 = vrot.lane.b32.xlu0 %v63, 1
    %v236 = vpop.permute.xlu0 %235
    %237 = vrot.lane.b32.xlu0 %v65, 1
    %v238 = vpop.permute.xlu0 %237
    %vm239 = vcmp.lt.s32.totalorder %v83, 1
    %v240 = vsel %vm239, %v232, %v236
    %v241 = vsel %vm239, %v234, %v238
    %v242 = vsel %vm239, %v228, %v232
    %v243 = vsel %vm239, %v230, %v234
    %v244 = vsel %vm239, %v224, %v228
    %v245 = vsel %vm239, %v226, %v230
    %v246 = vsel %vm239, %v236, %v224
    %v247 = vsel %vm239, %v238, %v226
    %s248 = scalar_lea.vmem [#allocation3], 12
    %v249 = vld [vmem:[%s248] sm:$0xf]
    %v251 = vperm.slane %v249, 0
    %v252 = vperm.slane %v249, 1
    %v253 = vperm.slane %v249, 2
    %v254 = vperm.slane %v249, 3
    %v259 = vmul.f32 %v246, %v251
    %v260 = vmul.f32 %v244, %v252
    %v261 = vmul.f32 %v242, %v253
    %v262 = vmul.f32 %v240, %v254
    %v263 = vmul.f32 %v247, %v251
    %v264 = vmul.f32 %v245, %v252
    %v265 = vmul.f32 %v243, %v253
    %v266 = vmul.f32 %v241, %v254
    %v267 = vpack.c.bf16 %v260, %v259
    %v268 = vpack.c.bf16 %v262, %v261
    %v269 = vpack.c.bf16 %v264, %v263
    %v270 = vpack.c.bf16 %v266, %v265
    %271 = vst [vmem:[#allocation2 + $0x60] sm:$0xff] %v267
    %272 = vst [vmem:[#allocation2 + $0x68] sm:$0xff] %v268
    %273 = vst [vmem:[#allocation2 + $0x70] sm:$0xff] %v269
    %274 = vst [vmem:[#allocation2 + $0x78] sm:$0xff] %v270
    %v275 = vpack.c.bf16 %v58, %v57
    %v276 = vpack.c.bf16 %v63, %v62
    %v277 = vpack.c.bf16 %v60, %v59
    %v278 = vpack.c.bf16 %v65, %v64
    %279 = vst [vmem:[#allocation2 + $0x80] sm:$0xff] %v275
    %280 = vst [vmem:[#allocation2 + $0x88] sm:$0xff] %v276
    %281 = vst [vmem:[#allocation2 + $0x90] sm:$0xff] %v277
    %282 = vst [vmem:[#allocation2 + $0x98] sm:$0xff] %v278
    %283 = vrot.lane.b32.xlu0 %v57, 127
    %v284 = vpop.permute.xlu0 %283
    %285 = vrot.lane.b32.xlu0 %v59, 127
    %v286 = vpop.permute.xlu0 %285
    %287 = vrot.lane.b32.xlu0 %v58, 127
    %v288 = vpop.permute.xlu0 %287
    %289 = vrot.lane.b32.xlu0 %v60, 127
    %v290 = vpop.permute.xlu0 %289
    %291 = vrot.lane.b32.xlu0 %v62, 127
    %v292 = vpop.permute.xlu0 %291
    %293 = vrot.lane.b32.xlu0 %v64, 127
    %v294 = vpop.permute.xlu0 %293
    %295 = vrot.lane.b32.xlu0 %v63, 127
    %v296 = vpop.permute.xlu0 %295
    %297 = vrot.lane.b32.xlu0 %v65, 127
    %v298 = vpop.permute.xlu0 %297
    %vm299 = vcmp.lt.s32.totalorder %v83, 127
    %v300 = vsel %vm299, %v292, %v296
    %v301 = vsel %vm299, %v294, %v298
    %v302 = vsel %vm299, %v288, %v292
    %v303 = vsel %vm299, %v290, %v294
    %v304 = vsel %vm299, %v284, %v288
    %v305 = vsel %vm299, %v286, %v290
    %v306 = vsel %vm299, %v296, %v284
    %v307 = vsel %vm299, %v298, %v286
    %s308 = scalar_lea.vmem [#allocation3], 20
    %v309 = vld [vmem:[%s308] sm:$0xf]
    %v311 = vperm.slane %v309, 0
    %v312 = vperm.slane %v309, 1
    %v313 = vperm.slane %v309, 2
    %v314 = vperm.slane %v309, 3
    %v319 = vmul.f32 %v304, %v311
    %v320 = vmul.f32 %v302, %v312
    %v321 = vmul.f32 %v300, %v313
    %v322 = vmul.f32 %v306, %v314
    %v323 = vmul.f32 %v305, %v311
    %v324 = vmul.f32 %v303, %v312
    %v325 = vmul.f32 %v301, %v313
    %v326 = vmul.f32 %v307, %v314
    %v327 = vpack.c.bf16 %v320, %v319
    %v328 = vpack.c.bf16 %v322, %v321
    %v329 = vpack.c.bf16 %v324, %v323
    %v330 = vpack.c.bf16 %v326, %v325
    %331 = vst [vmem:[#allocation2 + $0xa0] sm:$0xff] %v327
    %332 = vst [vmem:[#allocation2 + $0xa8] sm:$0xff] %v328
    %333 = vst [vmem:[#allocation2 + $0xb0] sm:$0xff] %v329
    %334 = vst [vmem:[#allocation2 + $0xb8] sm:$0xff] %v330
    %335 = vrot.lane.b32.xlu0 %v57, 113
    %v336 = vpop.permute.xlu0 %335
    %337 = vrot.lane.b32.xlu0 %v59, 113
    %v338 = vpop.permute.xlu0 %337
    %339 = vrot.lane.b32.xlu0 %v58, 113
    %v340 = vpop.permute.xlu0 %339
    %341 = vrot.lane.b32.xlu0 %v60, 113
    %v342 = vpop.permute.xlu0 %341
    %343 = vrot.lane.b32.xlu0 %v62, 113
    %v344 = vpop.permute.xlu0 %343
    %345 = vrot.lane.b32.xlu0 %v64, 113
    %v346 = vpop.permute.xlu0 %345
    %347 = vrot.lane.b32.xlu0 %v63, 113
    %v348 = vpop.permute.xlu0 %347
    %349 = vrot.lane.b32.xlu0 %v65, 113
    %v350 = vpop.permute.xlu0 %349
    %vm351 = vcmp.lt.s32.totalorder %v83, 113
    %v352 = vsel %vm351, %v344, %v348
    %v353 = vsel %vm351, %v346, %v350
    %v354 = vsel %vm351, %v340, %v344
    %v355 = vsel %vm351, %v342, %v346
    %v356 = vsel %vm351, %v336, %v340
    %v357 = vsel %vm351, %v338, %v342
    %v358 = vsel %vm351, %v348, %v336
    %v359 = vsel %vm351, %v350, %v338
    %s360 = scalar_lea.vmem [#allocation3], 24
    %v361 = vld [vmem:[%s360] sm:$0xf]
    %v363 = vperm.slane %v361, 0
    %v364 = vperm.slane %v361, 1
    %v365 = vperm.slane %v361, 2
    %v366 = vperm.slane %v361, 3
    %v371 = vmul.f32 %v356, %v363
    %v372 = vmul.f32 %v354, %v364
    %v373 = vmul.f32 %v352, %v365
    %v374 = vmul.f32 %v358, %v366
    %v375 = vmul.f32 %v357, %v363
    %v376 = vmul.f32 %v355, %v364
    %v377 = vmul.f32 %v353, %v365
    %v378 = vmul.f32 %v359, %v366
    %v379 = vpack.c.bf16 %v372, %v371
    %v380 = vpack.c.bf16 %v374, %v373
    %v381 = vpack.c.bf16 %v376, %v375
    %v382 = vpack.c.bf16 %v378, %v377
    %383 = vst [vmem:[#allocation2 + $0xc0] sm:$0xff] %v379
    %384 = vst [vmem:[#allocation2 + $0xc8] sm:$0xff] %v380
    %385 = vst [vmem:[#allocation2 + $0xd0] sm:$0xff] %v381
    %386 = vst [vmem:[#allocation2 + $0xd8] sm:$0xff] %v382
    %387 = vrot.lane.b32.xlu0 %v57, 112
    %v388 = vpop.permute.xlu0 %387
    %389 = vrot.lane.b32.xlu0 %v59, 112
    %v390 = vpop.permute.xlu0 %389
    %391 = vrot.lane.b32.xlu0 %v58, 112
    %v392 = vpop.permute.xlu0 %391
    %393 = vrot.lane.b32.xlu0 %v60, 112
    %v394 = vpop.permute.xlu0 %393
    %395 = vrot.lane.b32.xlu0 %v62, 112
    %v396 = vpop.permute.xlu0 %395
    %397 = vrot.lane.b32.xlu0 %v64, 112
    %v398 = vpop.permute.xlu0 %397
    %399 = vrot.lane.b32.xlu0 %v63, 112
    %v400 = vpop.permute.xlu0 %399
    %401 = vrot.lane.b32.xlu0 %v65, 112
    %v402 = vpop.permute.xlu0 %401
    %vm403 = vcmp.lt.s32.totalorder %v83, 112
    %v404 = vsel %vm403, %v396, %v400
    %v405 = vsel %vm403, %v398, %v402
    %v406 = vsel %vm403, %v392, %v396
    %v407 = vsel %vm403, %v394, %v398
    %v408 = vsel %vm403, %v388, %v392
    %v409 = vsel %vm403, %v390, %v394
    %v410 = vsel %vm403, %v400, %v388
    %v411 = vsel %vm403, %v402, %v390
    %s412 = scalar_lea.vmem [#allocation3], 28
    %v413 = vld [vmem:[%s412] sm:$0xf]
    %v415 = vperm.slane %v413, 0
    %v416 = vperm.slane %v413, 1
    %v417 = vperm.slane %v413, 2
    %v418 = vperm.slane %v413, 3
    %v423 = vmul.f32 %v408, %v415
    %v424 = vmul.f32 %v406, %v416
    %v425 = vmul.f32 %v404, %v417
    %v426 = vmul.f32 %v410, %v418
    %v427 = vmul.f32 %v409, %v415
    %v428 = vmul.f32 %v407, %v416
    %v429 = vmul.f32 %v405, %v417
    %v430 = vmul.f32 %v411, %v418
    %v431 = vpack.c.bf16 %v424, %v423
    %v432 = vpack.c.bf16 %v426, %v425
    %v433 = vpack.c.bf16 %v428, %v427
    %v434 = vpack.c.bf16 %v430, %v429
    %435 = vst [vmem:[#allocation2 + $0xe0] sm:$0xff] %v431
    %436 = vst [vmem:[#allocation2 + $0xe8] sm:$0xff] %v432
    %437 = vst [vmem:[#allocation2 + $0xf0] sm:$0xff] %v433
    %438 = vst [vmem:[#allocation2 + $0xf8] sm:$0xff] %v434
    %439 = vrot.lane.b32.xlu0 %v57, 111
    %v440 = vpop.permute.xlu0 %439
    %441 = vrot.lane.b32.xlu0 %v59, 111
    %v442 = vpop.permute.xlu0 %441
    %443 = vrot.lane.b32.xlu0 %v58, 111
    %v444 = vpop.permute.xlu0 %443
    %445 = vrot.lane.b32.xlu0 %v60, 111
    %v446 = vpop.permute.xlu0 %445
    %447 = vrot.lane.b32.xlu0 %v62, 111
    %v448 = vpop.permute.xlu0 %447
    %449 = vrot.lane.b32.xlu0 %v64, 111
    %v450 = vpop.permute.xlu0 %449
    %451 = vrot.lane.b32.xlu0 %v63, 111
    %v452 = vpop.permute.xlu0 %451
    %453 = vrot.lane.b32.xlu0 %v65, 111
    %v454 = vpop.permute.xlu0 %453
    %vm455 = vcmp.lt.s32.totalorder %v83, 111
    %v456 = vsel %vm455, %v448, %v452
    %v457 = vsel %vm455, %v450, %v454
    %v458 = vsel %vm455, %v444, %v448
    %v459 = vsel %vm455, %v446, %v450
    %v460 = vsel %vm455, %v440, %v444
    %v461 = vsel %vm455, %v442, %v446
    %v462 = vsel %vm455, %v452, %v440
    %v463 = vsel %vm455, %v454, %v442
    %s464 = scalar_lea.vmem [#allocation3], 32
    %v465 = vld [vmem:[%s464] sm:$0xf]
    %v467 = vperm.slane %v465, 0
    %v468 = vperm.slane %v465, 1
    %v469 = vperm.slane %v465, 2
    %v470 = vperm.slane %v465, 3
    %v475 = vmul.f32 %v460, %v467
    %v476 = vmul.f32 %v458, %v468
    %v477 = vmul.f32 %v456, %v469
    %v478 = vmul.f32 %v462, %v470
    %v479 = vmul.f32 %v461, %v467
    %v480 = vmul.f32 %v459, %v468
    %v481 = vmul.f32 %v457, %v469
    %v482 = vmul.f32 %v463, %v470
    %v483 = vpack.c.bf16 %v476, %v475
    %v484 = vpack.c.bf16 %v478, %v477
    %v485 = vpack.c.bf16 %v480, %v479
    %v486 = vpack.c.bf16 %v482, %v481
    %487 = vst [vmem:[#allocation2 + $0x100] sm:$0xff] %v483
    %488 = vst [vmem:[#allocation2 + $0x108] sm:$0xff] %v484
    %489 = vst [vmem:[#allocation2 + $0x110] sm:$0xff] %v485
    %490 = vst [vmem:[#allocation2 + $0x118] sm:$0xff] %v486
    %v491 = vld [vmem:[%s2] sm:$0xff]
    %v492 = vld [vmem:[%s2 + $0x8] sm:$0xff]
    %v493 = vld [vmem:[#allocation2] sm:$0xff]
    %v494 = vld [vmem:[#allocation2 + $0x8] sm:$0xff]
    %v495 = vld [vmem:[#allocation2 + $0x10] sm:$0xff]
    %v496 = vld [vmem:[#allocation2 + $0x18] sm:$0xff]
    %v497 = vld [vmem:[#allocation2 + $0x20] sm:$0xff]
    %v498 = vld [vmem:[#allocation2 + $0x28] sm:$0xff]
    %v499 = vld [vmem:[#allocation2 + $0x30] sm:$0xff]
    %v500 = vld [vmem:[#allocation2 + $0x38] sm:$0xff]
    %v501 = vld [vmem:[#allocation2 + $0x40] sm:$0xff]
    %v502 = vld [vmem:[#allocation2 + $0x48] sm:$0xff]
    %v503 = vld [vmem:[#allocation2 + $0x50] sm:$0xff]
    %v504 = vld [vmem:[#allocation2 + $0x58] sm:$0xff]
    %v505 = vld [vmem:[#allocation2 + $0x60] sm:$0xff]
    %v506 = vld [vmem:[#allocation2 + $0x68] sm:$0xff]
    %v507 = vld [vmem:[#allocation2 + $0x70] sm:$0xff]
    %v508 = vld [vmem:[#allocation2 + $0x78] sm:$0xff]
    %v509 = vld [vmem:[#allocation2 + $0x80] sm:$0xff]
    %v510 = vld [vmem:[#allocation2 + $0x88] sm:$0xff]
    %v511 = vld [vmem:[#allocation2 + $0x90] sm:$0xff]
    %v512 = vld [vmem:[#allocation2 + $0x98] sm:$0xff]
    %v513 = vld [vmem:[#allocation2 + $0xa0] sm:$0xff]
    %v514 = vld [vmem:[#allocation2 + $0xa8] sm:$0xff]
    %v515 = vld [vmem:[#allocation2 + $0xb0] sm:$0xff]
    %v516 = vld [vmem:[#allocation2 + $0xb8] sm:$0xff]
    %v517 = vld [vmem:[#allocation2 + $0xc0] sm:$0xff]
    %v518 = vld [vmem:[#allocation2 + $0xc8] sm:$0xff]
    %v519 = vld [vmem:[#allocation2 + $0xd0] sm:$0xff]
    %v520 = vld [vmem:[#allocation2 + $0xd8] sm:$0xff]
    %v521 = vld [vmem:[#allocation2 + $0xe0] sm:$0xff]
    %v522 = vld [vmem:[#allocation2 + $0xe8] sm:$0xff]
    %v523 = vld [vmem:[#allocation2 + $0xf0] sm:$0xff]
    %v524 = vld [vmem:[#allocation2 + $0xf8] sm:$0xff]
    %v525 = vld [vmem:[#allocation2 + $0x100] sm:$0xff]
    %v526 = vld [vmem:[#allocation2 + $0x108] sm:$0xff]
    %v527 = vld [vmem:[#allocation2 + $0x110] sm:$0xff]
    %v528 = vld [vmem:[#allocation2 + $0x118] sm:$0xff]
    %v529 = vld [vmem:[%s3] sm:$0xff]
    %v530 = vld [vmem:[%s3 + $0x8] sm:$0xff]
    %532 = vset.pattern.permute.xlu0 0
    %533 = vperm.xlu0 %532, %v529
    %v534 = vpop.permute.xlu0 %533
    %537 = vset.pattern.permute.xlu0 0
    %538 = vperm.xlu0 %537, %v530
    %v539 = vpop.permute.xlu0 %538
    %v543 = vunpack.c.l.b16 %v491
    %v544 = vunpack.c.h.b16 %v491
    %v545 = vunpack.c.l.b16 %v492
    %v546 = vunpack.c.h.b16 %v492
    %v547 = vpack.c.b16 %v545, %v543
    %v548 = vpack.c.b16 %v546, %v544
    %v586 = vunpack.c.l.b16 %v493
    %v587 = vunpack.c.h.b16 %v493
    %v588 = vunpack.c.l.b16 %v494
    %v589 = vunpack.c.h.b16 %v494
    %v590 = vunpack.c.l.b16 %v495
    %v591 = vunpack.c.h.b16 %v495
    %v592 = vunpack.c.l.b16 %v496
    %v593 = vunpack.c.h.b16 %v496
    %v594 = vunpack.c.l.b16 %v497
    %v595 = vunpack.c.h.b16 %v497
    %v596 = vunpack.c.l.b16 %v498
    %v597 = vunpack.c.h.b16 %v498
    %v598 = vunpack.c.l.b16 %v499
    %v599 = vunpack.c.h.b16 %v499
    %v600 = vunpack.c.l.b16 %v500
    %v601 = vunpack.c.h.b16 %v500
    %v602 = vunpack.c.l.b16 %v501
    %v603 = vunpack.c.h.b16 %v501
    %v604 = vunpack.c.l.b16 %v502
    %v605 = vunpack.c.h.b16 %v502
    %v606 = vunpack.c.l.b16 %v503
    %v607 = vunpack.c.h.b16 %v503
    %v608 = vunpack.c.l.b16 %v504
    %v609 = vunpack.c.h.b16 %v504
    %v610 = vunpack.c.l.b16 %v505
    %v611 = vunpack.c.h.b16 %v505
    %v612 = vunpack.c.l.b16 %v506
    %v613 = vunpack.c.h.b16 %v506
    %v614 = vunpack.c.l.b16 %v507
    %v615 = vunpack.c.h.b16 %v507
    %v616 = vunpack.c.l.b16 %v508
    %v617 = vunpack.c.h.b16 %v508
    %v618 = vunpack.c.l.b16 %v509
    %v619 = vunpack.c.h.b16 %v509
    %v620 = vunpack.c.l.b16 %v510
    %v621 = vunpack.c.h.b16 %v510
    %v622 = vunpack.c.l.b16 %v511
    %v623 = vunpack.c.h.b16 %v511
    %v624 = vunpack.c.l.b16 %v512
    %v625 = vunpack.c.h.b16 %v512
    %v626 = vunpack.c.l.b16 %v513
    %v627 = vunpack.c.h.b16 %v513
    %v628 = vunpack.c.l.b16 %v514
    %v629 = vunpack.c.h.b16 %v514
    %v630 = vunpack.c.l.b16 %v515
    %v631 = vunpack.c.h.b16 %v515
    %v632 = vunpack.c.l.b16 %v516
    %v633 = vunpack.c.h.b16 %v516
    %v634 = vunpack.c.l.b16 %v517
    %v635 = vunpack.c.h.b16 %v517
    %v636 = vunpack.c.l.b16 %v518
    %v637 = vunpack.c.h.b16 %v518
    %v638 = vunpack.c.l.b16 %v519
    %v639 = vunpack.c.h.b16 %v519
    %v640 = vunpack.c.l.b16 %v520
    %v641 = vunpack.c.h.b16 %v520
    %v642 = vunpack.c.l.b16 %v521
    %v643 = vunpack.c.h.b16 %v521
    %v644 = vunpack.c.l.b16 %v522
    %v645 = vunpack.c.h.b16 %v522
    %v646 = vunpack.c.l.b16 %v523
    %v647 = vunpack.c.h.b16 %v523
    %v648 = vunpack.c.l.b16 %v524
    %v649 = vunpack.c.h.b16 %v524
    %v650 = vunpack.c.l.b16 %v525
    %v651 = vunpack.c.h.b16 %v525
    %v652 = vunpack.c.l.b16 %v526
    %v653 = vunpack.c.h.b16 %v526
    %v654 = vunpack.c.l.b16 %v527
    %v655 = vunpack.c.h.b16 %v527
    %v656 = vunpack.c.l.b16 %v528
    %v657 = vunpack.c.h.b16 %v528
    %v658 = vpack.c.b16 %v590, %v586
    %v659 = vpack.c.b16 %v591, %v587
    %v660 = vpack.c.b16 %v592, %v588
    %v661 = vpack.c.b16 %v593, %v589
    %v662 = vpack.c.b16 %v598, %v594
    %v663 = vpack.c.b16 %v599, %v595
    %v664 = vpack.c.b16 %v600, %v596
    %v665 = vpack.c.b16 %v601, %v597
    %v666 = vpack.c.b16 %v606, %v602
    %v667 = vpack.c.b16 %v607, %v603
    %v668 = vpack.c.b16 %v608, %v604
    %v669 = vpack.c.b16 %v609, %v605
    %v670 = vpack.c.b16 %v614, %v610
    %v671 = vpack.c.b16 %v615, %v611
    %v672 = vpack.c.b16 %v616, %v612
    %v673 = vpack.c.b16 %v617, %v613
    %v674 = vpack.c.b16 %v622, %v618
    %v675 = vpack.c.b16 %v623, %v619
    %v676 = vpack.c.b16 %v624, %v620
    %v677 = vpack.c.b16 %v625, %v621
    %v678 = vpack.c.b16 %v630, %v626
    %v679 = vpack.c.b16 %v631, %v627
    %v680 = vpack.c.b16 %v632, %v628
    %v681 = vpack.c.b16 %v633, %v629
    %v682 = vpack.c.b16 %v638, %v634
    %v683 = vpack.c.b16 %v639, %v635
    %v684 = vpack.c.b16 %v640, %v636
    %v685 = vpack.c.b16 %v641, %v637
    %v686 = vpack.c.b16 %v646, %v642
    %v687 = vpack.c.b16 %v647, %v643
    %v688 = vpack.c.b16 %v648, %v644
    %v689 = vpack.c.b16 %v649, %v645
    %v690 = vpack.c.b16 %v654, %v650
    %v691 = vpack.c.b16 %v655, %v651
    %v692 = vpack.c.b16 %v656, %v652
    %v693 = vpack.c.b16 %v657, %v653
    %vm730 = vcmask 130048
    %v732 = vsel %vm730, %v548, 0
    %734 = vmatpush.bf16.msra.mxu0 %v686
    %735 = vmatpush.bf16.msra.mxu0 %v682
    %736 = vmatpush.bf16.msra.mxu0 %v678
    %737 = vmatpush.bf16.msra.mxu0 %v674
    %738 = vmatpush.bf16.msra.mxu0 %v670
    %739 = vmatpush.bf16.msra.mxu0 %v666
    %740 = vmatpush.bf16.msra.mxu0 %v662
    %741 = vmatpush.bf16.msra.mxu0 %v658
    %742 = vmatmul.bf16.gmra.mxu0 %v547
    %v743 = vpop.f32.mrf.mxu0
    %v744 = vadd.f32 %v534, %v743
    %v745 = vpop.f32.mrf.mxu0
    %v746 = vadd.f32 %v539, %v745
    %747 = vdwg.mxu0
    %748 = vmatpush.bf16.msra.mxu0 0
    %749 = vmatpush.bf16.msra.mxu0 0
    %750 = vmatpush.bf16.msra.mxu0 0
    %751 = vmatpush.bf16.msra.mxu0 0
    %752 = vmatpush.bf16.msra.mxu0 0
    %753 = vmatpush.bf16.msra.mxu0 0
    %754 = vmatpush.bf16.msra.mxu0 0
    %755 = vmatpush.bf16.msra.mxu0 %v690
    %756 = vmatmul.bf16.gmra.mxu0 %v732
    %v757 = vpop.f32.mrf.mxu0
    %v758 = vadd.f32 %v744, %v757
    %v759 = vpop.f32.mrf.mxu0
    %v760 = vadd.f32 %v746, %v759
    %761 = vdwg.mxu0
    %762 = vmatpush.bf16.msra.mxu0 %v687
    %763 = vmatpush.bf16.msra.mxu0 %v683
    %764 = vmatpush.bf16.msra.mxu0 %v679
    %765 = vmatpush.bf16.msra.mxu0 %v675
    %766 = vmatpush.bf16.msra.mxu0 %v671
    %767 = vmatpush.bf16.msra.mxu0 %v667
    %768 = vmatpush.bf16.msra.mxu0 %v663
    %769 = vmatpush.bf16.msra.mxu0 %v659
    %770 = vmatmul.bf16.gmra.mxu0 %v547
    %v771 = vpop.f32.mrf.mxu0
    %v772 = vadd.f32 %v534, %v771
    %v773 = vpop.f32.mrf.mxu0
    %v774 = vadd.f32 %v539, %v773
    %775 = vdwg.mxu0
    %776 = vmatpush.bf16.msra.mxu0 0
    %777 = vmatpush.bf16.msra.mxu0 0
    %778 = vmatpush.bf16.msra.mxu0 0
    %779 = vmatpush.bf16.msra.mxu0 0
    %780 = vmatpush.bf16.msra.mxu0 0
    %781 = vmatpush.bf16.msra.mxu0 0
    %782 = vmatpush.bf16.msra.mxu0 0
    %783 = vmatpush.bf16.msra.mxu0 %v691
    %784 = vmatmul.bf16.gmra.mxu0 %v732
    %v785 = vpop.f32.mrf.mxu0
    %v786 = vadd.f32 %v772, %v785
    %v787 = vpop.f32.mrf.mxu0
    %v788 = vadd.f32 %v774, %v787
    %789 = vdwg.mxu0
    %790 = vmatpush.bf16.msra.mxu0 %v688
    %791 = vmatpush.bf16.msra.mxu0 %v684
    %792 = vmatpush.bf16.msra.mxu0 %v680
    %793 = vmatpush.bf16.msra.mxu0 %v676
    %794 = vmatpush.bf16.msra.mxu0 %v672
    %795 = vmatpush.bf16.msra.mxu0 %v668
    %796 = vmatpush.bf16.msra.mxu0 %v664
    %797 = vmatpush.bf16.msra.mxu0 %v660
    %798 = vmatmul.bf16.gmra.mxu0 %v547
    %v799 = vpop.f32.mrf.mxu0
    %v800 = vadd.f32 %v534, %v799
    %v801 = vpop.f32.mrf.mxu0
    %v802 = vadd.f32 %v539, %v801
    %803 = vdwg.mxu0
    %804 = vmatpush.bf16.msra.mxu0 0
    %805 = vmatpush.bf16.msra.mxu0 0
    %806 = vmatpush.bf16.msra.mxu0 0
    %807 = vmatpush.bf16.msra.mxu0 0
    %808 = vmatpush.bf16.msra.mxu0 0
    %809 = vmatpush.bf16.msra.mxu0 0
    %810 = vmatpush.bf16.msra.mxu0 0
    %811 = vmatpush.bf16.msra.mxu0 %v692
    %812 = vmatmul.bf16.gmra.mxu0 %v732
    %v813 = vpop.f32.mrf.mxu0
    %v814 = vadd.f32 %v800, %v813
    %v815 = vpop.f32.mrf.mxu0
    %v816 = vadd.f32 %v802, %v815
    %817 = vdwg.mxu0
    %818 = vmatpush.bf16.msra.mxu0 %v689
    %819 = vmatpush.bf16.msra.mxu0 %v685
    %820 = vmatpush.bf16.msra.mxu0 %v681
    %821 = vmatpush.bf16.msra.mxu0 %v677
    %822 = vmatpush.bf16.msra.mxu0 %v673
    %823 = vmatpush.bf16.msra.mxu0 %v669
    %824 = vmatpush.bf16.msra.mxu0 %v665
    %825 = vmatpush.bf16.msra.mxu0 %v661
    %826 = vmatmul.bf16.gmra.mxu0 %v547
    %v827 = vpop.f32.mrf.mxu0
    %v828 = vadd.f32 %v534, %v827
    %v829 = vpop.f32.mrf.mxu0
    %v830 = vadd.f32 %v539, %v829
    %831 = vdwg.mxu0
    %832 = vmatpush.bf16.msra.mxu0 0
    %833 = vmatpush.bf16.msra.mxu0 0
    %834 = vmatpush.bf16.msra.mxu0 0
    %835 = vmatpush.bf16.msra.mxu0 0
    %836 = vmatpush.bf16.msra.mxu0 0
    %837 = vmatpush.bf16.msra.mxu0 0
    %838 = vmatpush.bf16.msra.mxu0 0
    %839 = vmatpush.bf16.msra.mxu0 %v693
    %840 = vmatmul.bf16.gmra.mxu0 %v732
    %v841 = vpop.f32.mrf.mxu0
    %v842 = vadd.f32 %v828, %v841
    %v843 = vpop.f32.mrf.mxu0
    %v844 = vadd.f32 %v830, %v843
    %845 = vdwg.mxu0
    %v846 = vmax.f32 %v758, 0.0
    %v847 = vmax.f32 %v786, 0.0
    %v848 = vmax.f32 %v814, 0.0
    %v849 = vmax.f32 %v842, 0.0
    %v850 = vmax.f32 %v760, 0.0
    %v851 = vmax.f32 %v788, 0.0
    %v852 = vmax.f32 %v816, 0.0
    %v853 = vmax.f32 %v844, 0.0
    %854 = vrot.lane.b32.xlu0 %v846, 17
    %v855 = vpop.permute.xlu0 %854
    %856 = vrot.lane.b32.xlu0 %v850, 17
    %v857 = vpop.permute.xlu0 %856
    %858 = vrot.lane.b32.xlu0 %v847, 17
    %v859 = vpop.permute.xlu0 %858
    %860 = vrot.lane.b32.xlu0 %v851, 17
    %v861 = vpop.permute.xlu0 %860
    %862 = vrot.lane.b32.xlu0 %v848, 17
    %v863 = vpop.permute.xlu0 %862
    %864 = vrot.lane.b32.xlu0 %v852, 17
    %v865 = vpop.permute.xlu0 %864
    %866 = vrot.lane.b32.xlu0 %v849, 17
    %v867 = vpop.permute.xlu0 %866
    %868 = vrot.lane.b32.xlu0 %v853, 17
    %v869 = vpop.permute.xlu0 %868
    %v870 = vsel %vm84, %v863, %v867
    %v871 = vsel %vm84, %v865, %v869
    %v872 = vsel %vm84, %v859, %v863
    %v873 = vsel %vm84, %v861, %v865
    %v874 = vsel %vm84, %v855, %v859
    %v875 = vsel %vm84, %v857, %v861
    %v876 = vsel %vm84, %v867, %v855
    %v877 = vsel %vm84, %v869, %v857
    %v878 = vld [vmem:[#allocation3] sm:$0xf]
    %v880 = vperm.slane %v878, 0
    %v881 = vperm.slane %v878, 1
    %v882 = vperm.slane %v878, 2
    %v883 = vperm.slane %v878, 3
    %v888 = vmul.f32 %v876, %v880
    %v889 = vmul.f32 %v874, %v881
    %v890 = vmul.f32 %v872, %v882
    %v891 = vmul.f32 %v870, %v883
    %v892 = vmul.f32 %v877, %v880
    %v893 = vmul.f32 %v875, %v881
    %v894 = vmul.f32 %v873, %v882
    %v895 = vmul.f32 %v871, %v883
    %v896 = vpack.c.bf16 %v889, %v888
    %v897 = vpack.c.bf16 %v891, %v890
    %v898 = vpack.c.bf16 %v893, %v892
    %v899 = vpack.c.bf16 %v895, %v894
    %900 = vst [vmem:[#allocation2] sm:$0xff] %v896
    %901 = vst [vmem:[#allocation2 + $0x8] sm:$0xff] %v897
    %902 = vst [vmem:[#allocation2 + $0x10] sm:$0xff] %v898
    %903 = vst [vmem:[#allocation2 + $0x18] sm:$0xff] %v899
    %904 = vrot.lane.b32.xlu0 %v846, 16
    %v905 = vpop.permute.xlu0 %904
    %906 = vrot.lane.b32.xlu0 %v850, 16
    %v907 = vpop.permute.xlu0 %906
    %908 = vrot.lane.b32.xlu0 %v847, 16
    %v909 = vpop.permute.xlu0 %908
    %910 = vrot.lane.b32.xlu0 %v851, 16
    %v911 = vpop.permute.xlu0 %910
    %912 = vrot.lane.b32.xlu0 %v848, 16
    %v913 = vpop.permute.xlu0 %912
    %914 = vrot.lane.b32.xlu0 %v852, 16
    %v915 = vpop.permute.xlu0 %914
    %916 = vrot.lane.b32.xlu0 %v849, 16
    %v917 = vpop.permute.xlu0 %916
    %918 = vrot.lane.b32.xlu0 %v853, 16
    %v919 = vpop.permute.xlu0 %918
    %v920 = vsel %vm135, %v913, %v917
    %v921 = vsel %vm135, %v915, %v919
    %v922 = vsel %vm135, %v909, %v913
    %v923 = vsel %vm135, %v911, %v915
    %v924 = vsel %vm135, %v905, %v909
    %v925 = vsel %vm135, %v907, %v911
    %v926 = vsel %vm135, %v917, %v905
    %v927 = vsel %vm135, %v919, %v907
    %v928 = vld [vmem:[%s144] sm:$0xf]
    %v930 = vperm.slane %v928, 0
    %v931 = vperm.slane %v928, 1
    %v932 = vperm.slane %v928, 2
    %v933 = vperm.slane %v928, 3
    %v938 = vmul.f32 %v926, %v930
    %v939 = vmul.f32 %v924, %v931
    %v940 = vmul.f32 %v922, %v932
    %v941 = vmul.f32 %v920, %v933
    %v942 = vmul.f32 %v927, %v930
    %v943 = vmul.f32 %v925, %v931
    %v944 = vmul.f32 %v923, %v932
    %v945 = vmul.f32 %v921, %v933
    %v946 = vpack.c.bf16 %v939, %v938
    %v947 = vpack.c.bf16 %v941, %v940
    %v948 = vpack.c.bf16 %v943, %v942
    %v949 = vpack.c.bf16 %v945, %v944
    %950 = vst [vmem:[#allocation2 + $0x20] sm:$0xff] %v946
    %951 = vst [vmem:[#allocation2 + $0x28] sm:$0xff] %v947
    %952 = vst [vmem:[#allocation2 + $0x30] sm:$0xff] %v948
    %953 = vst [vmem:[#allocation2 + $0x38] sm:$0xff] %v949
    %954 = vrot.lane.b32.xlu0 %v846, 15
    %v955 = vpop.permute.xlu0 %954
    %956 = vrot.lane.b32.xlu0 %v850, 15
    %v957 = vpop.permute.xlu0 %956
    %958 = vrot.lane.b32.xlu0 %v847, 15
    %v959 = vpop.permute.xlu0 %958
    %960 = vrot.lane.b32.xlu0 %v851, 15
    %v961 = vpop.permute.xlu0 %960
    %962 = vrot.lane.b32.xlu0 %v848, 15
    %v963 = vpop.permute.xlu0 %962
    %964 = vrot.lane.b32.xlu0 %v852, 15
    %v965 = vpop.permute.xlu0 %964
    %966 = vrot.lane.b32.xlu0 %v849, 15
    %v967 = vpop.permute.xlu0 %966
    %968 = vrot.lane.b32.xlu0 %v853, 15
    %v969 = vpop.permute.xlu0 %968
    %v970 = vsel %vm187, %v963, %v967
    %v971 = vsel %vm187, %v965, %v969
    %v972 = vsel %vm187, %v959, %v963
    %v973 = vsel %vm187, %v961, %v965
    %v974 = vsel %vm187, %v955, %v959
    %v975 = vsel %vm187, %v957, %v961
    %v976 = vsel %vm187, %v967, %v955
    %v977 = vsel %vm187, %v969, %v957
    %v978 = vld [vmem:[%s196] sm:$0xf]
    %v980 = vperm.slane %v978, 0
    %v981 = vperm.slane %v978, 1
    %v982 = vperm.slane %v978, 2
    %v983 = vperm.slane %v978, 3
    %v988 = vmul.f32 %v976, %v980
    %v989 = vmul.f32 %v974, %v981
    %v990 = vmul.f32 %v972, %v982
    %v991 = vmul.f32 %v970, %v983
    %v992 = vmul.f32 %v977, %v980
    %v993 = vmul.f32 %v975, %v981
    %v994 = vmul.f32 %v973, %v982
    %v995 = vmul.f32 %v971, %v983
    %v996 = vpack.c.bf16 %v989, %v988
    %v997 = vpack.c.bf16 %v991, %v990
    %v998 = vpack.c.bf16 %v993, %v992
    %v999 = vpack.c.bf16 %v995, %v994
    %1000 = vst [vmem:[#allocation2 + $0x40] sm:$0xff] %v996
    %1001 = vst [vmem:[#allocation2 + $0x48] sm:$0xff] %v997
    %1002 = vst [vmem:[#allocation2 + $0x50] sm:$0xff] %v998
    %1003 = vst [vmem:[#allocation2 + $0x58] sm:$0xff] %v999
    %1004 = vrot.lane.b32.xlu0 %v846, 1
    %v1005 = vpop.permute.xlu0 %1004
    %1006 = vrot.lane.b32.xlu0 %v850, 1
    %v1007 = vpop.permute.xlu0 %1006
    %1008 = vrot.lane.b32.xlu0 %v847, 1
    %v1009 = vpop.permute.xlu0 %1008
    %1010 = vrot.lane.b32.xlu0 %v851, 1
    %v1011 = vpop.permute.xlu0 %1010
    %1012 = vrot.lane.b32.xlu0 %v848, 1
    %v1013 = vpop.permute.xlu0 %1012
    %1014 = vrot.lane.b32.xlu0 %v852, 1
    %v1015 = vpop.permute.xlu0 %1014
    %1016 = vrot.lane.b32.xlu0 %v849, 1
    %v1017 = vpop.permute.xlu0 %1016
    %1018 = vrot.lane.b32.xlu0 %v853, 1
    %v1019 = vpop.permute.xlu0 %1018
    %v1020 = vsel %vm239, %v1013, %v1017
    %v1021 = vsel %vm239, %v1015, %v1019
    %v1022 = vsel %vm239, %v1009, %v1013
    %v1023 = vsel %vm239, %v1011, %v1015
    %v1024 = vsel %vm239, %v1005, %v1009
    %v1025 = vsel %vm239, %v1007, %v1011
    %v1026 = vsel %vm239, %v1017, %v1005
    %v1027 = vsel %vm239, %v1019, %v1007
    %v1028 = vld [vmem:[%s248] sm:$0xf]
    %v1030 = vperm.slane %v1028, 0
    %v1031 = vperm.slane %v1028, 1
    %v1032 = vperm.slane %v1028, 2
    %v1033 = vperm.slane %v1028, 3
    %v1038 = vmul.f32 %v1026, %v1030
    %v1039 = vmul.f32 %v1024, %v1031
    %v1040 = vmul.f32 %v1022, %v1032
    %v1041 = vmul.f32 %v1020, %v1033
    %v1042 = vmul.f32 %v1027, %v1030
    %v1043 = vmul.f32 %v1025, %v1031
    %v1044 = vmul.f32 %v1023, %v1032
    %v1045 = vmul.f32 %v1021, %v1033
    %v1046 = vpack.c.bf16 %v1039, %v1038
    %v1047 = vpack.c.bf16 %v1041, %v1040
    %v1048 = vpack.c.bf16 %v1043, %v1042
    %v1049 = vpack.c.bf16 %v1045, %v1044
    %1050 = vst [vmem:[#allocation2 + $0x60] sm:$0xff] %v1046
    %1051 = vst [vmem:[#allocation2 + $0x68] sm:$0xff] %v1047
    %1052 = vst [vmem:[#allocation2 + $0x70] sm:$0xff] %v1048
    %1053 = vst [vmem:[#allocation2 + $0x78] sm:$0xff] %v1049
    %v1054 = vpack.c.bf16 %v847, %v846
    %v1055 = vpack.c.bf16 %v849, %v848
    %v1056 = vpack.c.bf16 %v851, %v850
    %v1057 = vpack.c.bf16 %v853, %v852
    %1058 = vst [vmem:[#allocation2 + $0x80] sm:$0xff] %v1054
    %1059 = vst [vmem:[#allocation2 + $0x88] sm:$0xff] %v1055
    %1060 = vst [vmem:[#allocation2 + $0x90] sm:$0xff] %v1056
    %1061 = vst [vmem:[#allocation2 + $0x98] sm:$0xff] %v1057
    %1062 = vrot.lane.b32.xlu0 %v846, 127
    %v1063 = vpop.permute.xlu0 %1062
    %1064 = vrot.lane.b32.xlu0 %v850, 127
    %v1065 = vpop.permute.xlu0 %1064
    %1066 = vrot.lane.b32.xlu0 %v847, 127
    %v1067 = vpop.permute.xlu0 %1066
    %1068 = vrot.lane.b32.xlu0 %v851, 127
    %v1069 = vpop.permute.xlu0 %1068
    %1070 = vrot.lane.b32.xlu0 %v848, 127
    %v1071 = vpop.permute.xlu0 %1070
    %1072 = vrot.lane.b32.xlu0 %v852, 127
    %v1073 = vpop.permute.xlu0 %1072
    %1074 = vrot.lane.b32.xlu0 %v849, 127
    %v1075 = vpop.permute.xlu0 %1074
    %1076 = vrot.lane.b32.xlu0 %v853, 127
    %v1077 = vpop.permute.xlu0 %1076
    %v1078 = vsel %vm299, %v1071, %v1075
    %v1079 = vsel %vm299, %v1073, %v1077
    %v1080 = vsel %vm299, %v1067, %v1071
    %v1081 = vsel %vm299, %v1069, %v1073
    %v1082 = vsel %vm299, %v1063, %v1067
    %v1083 = vsel %vm299, %v1065, %v1069
    %v1084 = vsel %vm299, %v1075, %v1063
    %v1085 = vsel %vm299, %v1077, %v1065
    %v1086 = vld [vmem:[%s308] sm:$0xf]
    %v1088 = vperm.slane %v1086, 0
    %v1089 = vperm.slane %v1086, 1
    %v1090 = vperm.slane %v1086, 2
    %v1091 = vperm.slane %v1086, 3
    %v1096 = vmul.f32 %v1082, %v1088
    %v1097 = vmul.f32 %v1080, %v1089
    %v1098 = vmul.f32 %v1078, %v1090
    %v1099 = vmul.f32 %v1084, %v1091
    %v1100 = vmul.f32 %v1083, %v1088
    %v1101 = vmul.f32 %v1081, %v1089
    %v1102 = vmul.f32 %v1079, %v1090
    %v1103 = vmul.f32 %v1085, %v1091
    %v1104 = vpack.c.bf16 %v1097, %v1096
    %v1105 = vpack.c.bf16 %v1099, %v1098
    %v1106 = vpack.c.bf16 %v1101, %v1100
    %v1107 = vpack.c.bf16 %v1103, %v1102
    %1108 = vst [vmem:[#allocation2 + $0xa0] sm:$0xff] %v1104
    %1109 = vst [vmem:[#allocation2 + $0xa8] sm:$0xff] %v1105
    %1110 = vst [vmem:[#allocation2 + $0xb0] sm:$0xff] %v1106
    %1111 = vst [vmem:[#allocation2 + $0xb8] sm:$0xff] %v1107
    %1112 = vrot.lane.b32.xlu0 %v846, 113
    %v1113 = vpop.permute.xlu0 %1112
    %1114 = vrot.lane.b32.xlu0 %v850, 113
    %v1115 = vpop.permute.xlu0 %1114
    %1116 = vrot.lane.b32.xlu0 %v847, 113
    %v1117 = vpop.permute.xlu0 %1116
    %1118 = vrot.lane.b32.xlu0 %v851, 113
    %v1119 = vpop.permute.xlu0 %1118
    %1120 = vrot.lane.b32.xlu0 %v848, 113
    %v1121 = vpop.permute.xlu0 %1120
    %1122 = vrot.lane.b32.xlu0 %v852, 113
    %v1123 = vpop.permute.xlu0 %1122
    %1124 = vrot.lane.b32.xlu0 %v849, 113
    %v1125 = vpop.permute.xlu0 %1124
    %1126 = vrot.lane.b32.xlu0 %v853, 113
    %v1127 = vpop.permute.xlu0 %1126
    %v1128 = vsel %vm351, %v1121, %v1125
    %v1129 = vsel %vm351, %v1123, %v1127
    %v1130 = vsel %vm351, %v1117, %v1121
    %v1131 = vsel %vm351, %v1119, %v1123
    %v1132 = vsel %vm351, %v1113, %v1117
    %v1133 = vsel %vm351, %v1115, %v1119
    %v1134 = vsel %vm351, %v1125, %v1113
    %v1135 = vsel %vm351, %v1127, %v1115
    %v1136 = vld [vmem:[%s360] sm:$0xf]
    %v1138 = vperm.slane %v1136, 0
    %v1139 = vperm.slane %v1136, 1
    %v1140 = vperm.slane %v1136, 2
    %v1141 = vperm.slane %v1136, 3
    %v1146 = vmul.f32 %v1132, %v1138
    %v1147 = vmul.f32 %v1130, %v1139
    %v1148 = vmul.f32 %v1128, %v1140
    %v1149 = vmul.f32 %v1134, %v1141
    %v1150 = vmul.f32 %v1133, %v1138
    %v1151 = vmul.f32 %v1131, %v1139
    %v1152 = vmul.f32 %v1129, %v1140
    %v1153 = vmul.f32 %v1135, %v1141
    %v1154 = vpack.c.bf16 %v1147, %v1146
    %v1155 = vpack.c.bf16 %v1149, %v1148
    %v1156 = vpack.c.bf16 %v1151, %v1150
    %v1157 = vpack.c.bf16 %v1153, %v1152
    %1158 = vst [vmem:[#allocation2 + $0xc0] sm:$0xff] %v1154
    %1159 = vst [vmem:[#allocation2 + $0xc8] sm:$0xff] %v1155
    %1160 = vst [vmem:[#allocation2 + $0xd0] sm:$0xff] %v1156
    %1161 = vst [vmem:[#allocation2 + $0xd8] sm:$0xff] %v1157
    %1162 = vrot.lane.b32.xlu0 %v846, 112
    %v1163 = vpop.permute.xlu0 %1162
    %1164 = vrot.lane.b32.xlu0 %v850, 112
    %v1165 = vpop.permute.xlu0 %1164
    %1166 = vrot.lane.b32.xlu0 %v847, 112
    %v1167 = vpop.permute.xlu0 %1166
    %1168 = vrot.lane.b32.xlu0 %v851, 112
    %v1169 = vpop.permute.xlu0 %1168
    %1170 = vrot.lane.b32.xlu0 %v848, 112
    %v1171 = vpop.permute.xlu0 %1170
    %1172 = vrot.lane.b32.xlu0 %v852, 112
    %v1173 = vpop.permute.xlu0 %1172
    %1174 = vrot.lane.b32.xlu0 %v849, 112
    %v1175 = vpop.permute.xlu0 %1174
    %1176 = vrot.lane.b32.xlu0 %v853, 112
    %v1177 = vpop.permute.xlu0 %1176
    %v1178 = vsel %vm403, %v1171, %v1175
    %v1179 = vsel %vm403, %v1173, %v1177
    %v1180 = vsel %vm403, %v1167, %v1171
    %v1181 = vsel %vm403, %v1169, %v1173
    %v1182 = vsel %vm403, %v1163, %v1167
    %v1183 = vsel %vm403, %v1165, %v1169
    %v1184 = vsel %vm403, %v1175, %v1163
    %v1185 = vsel %vm403, %v1177, %v1165
    %v1186 = vld [vmem:[%s412] sm:$0xf]
    %v1188 = vperm.slane %v1186, 0
    %v1189 = vperm.slane %v1186, 1
    %v1190 = vperm.slane %v1186, 2
    %v1191 = vperm.slane %v1186, 3
    %v1196 = vmul.f32 %v1182, %v1188
    %v1197 = vmul.f32 %v1180, %v1189
    %v1198 = vmul.f32 %v1178, %v1190
    %v1199 = vmul.f32 %v1184, %v1191
    %v1200 = vmul.f32 %v1183, %v1188
    %v1201 = vmul.f32 %v1181, %v1189
    %v1202 = vmul.f32 %v1179, %v1190
    %v1203 = vmul.f32 %v1185, %v1191
    %v1204 = vpack.c.bf16 %v1197, %v1196
    %v1205 = vpack.c.bf16 %v1199, %v1198
    %v1206 = vpack.c.bf16 %v1201, %v1200
    %v1207 = vpack.c.bf16 %v1203, %v1202
    %1208 = vst [vmem:[#allocation2 + $0xe0] sm:$0xff] %v1204
    %1209 = vst [vmem:[#allocation2 + $0xe8] sm:$0xff] %v1205
    %1210 = vst [vmem:[#allocation2 + $0xf0] sm:$0xff] %v1206
    %1211 = vst [vmem:[#allocation2 + $0xf8] sm:$0xff] %v1207
    %1212 = vrot.lane.b32.xlu0 %v846, 111
    %v1213 = vpop.permute.xlu0 %1212
    %1214 = vrot.lane.b32.xlu0 %v850, 111
    %v1215 = vpop.permute.xlu0 %1214
    %1216 = vrot.lane.b32.xlu0 %v847, 111
    %v1217 = vpop.permute.xlu0 %1216
    %1218 = vrot.lane.b32.xlu0 %v851, 111
    %v1219 = vpop.permute.xlu0 %1218
    %1220 = vrot.lane.b32.xlu0 %v848, 111
    %v1221 = vpop.permute.xlu0 %1220
    %1222 = vrot.lane.b32.xlu0 %v852, 111
    %v1223 = vpop.permute.xlu0 %1222
    %1224 = vrot.lane.b32.xlu0 %v849, 111
    %v1225 = vpop.permute.xlu0 %1224
    %1226 = vrot.lane.b32.xlu0 %v853, 111
    %v1227 = vpop.permute.xlu0 %1226
    %v1228 = vsel %vm455, %v1221, %v1225
    %v1229 = vsel %vm455, %v1223, %v1227
    %v1230 = vsel %vm455, %v1217, %v1221
    %v1231 = vsel %vm455, %v1219, %v1223
    %v1232 = vsel %vm455, %v1213, %v1217
    %v1233 = vsel %vm455, %v1215, %v1219
    %v1234 = vsel %vm455, %v1225, %v1213
    %v1235 = vsel %vm455, %v1227, %v1215
    %v1236 = vld [vmem:[%s464] sm:$0xf]
    %v1238 = vperm.slane %v1236, 0
    %v1239 = vperm.slane %v1236, 1
    %v1240 = vperm.slane %v1236, 2
    %v1241 = vperm.slane %v1236, 3
    %v1246 = vmul.f32 %v1232, %v1238
    %v1247 = vmul.f32 %v1230, %v1239
    %v1248 = vmul.f32 %v1228, %v1240
    %v1249 = vmul.f32 %v1234, %v1241
    %v1250 = vmul.f32 %v1233, %v1238
    %v1251 = vmul.f32 %v1231, %v1239
    %v1252 = vmul.f32 %v1229, %v1240
    %v1253 = vmul.f32 %v1235, %v1241
    %v1254 = vpack.c.bf16 %v1247, %v1246
    %v1255 = vpack.c.bf16 %v1249, %v1248
    %v1256 = vpack.c.bf16 %v1251, %v1250
    %v1257 = vpack.c.bf16 %v1253, %v1252
    %1258 = vst [vmem:[#allocation2 + $0x100] sm:$0xff] %v1254
    %1259 = vst [vmem:[#allocation2 + $0x108] sm:$0xff] %v1255
    %1260 = vst [vmem:[#allocation2 + $0x110] sm:$0xff] %v1256
    %1261 = vst [vmem:[#allocation2 + $0x118] sm:$0xff] %v1257
    %v1262 = vld [vmem:[%s4] sm:$0xff]
    %v1263 = vld [vmem:[%s4 + $0x8] sm:$0xff]
    %v1264 = vld [vmem:[#allocation2] sm:$0xff]
    %v1265 = vld [vmem:[#allocation2 + $0x8] sm:$0xff]
    %v1266 = vld [vmem:[#allocation2 + $0x10] sm:$0xff]
    %v1267 = vld [vmem:[#allocation2 + $0x18] sm:$0xff]
    %v1268 = vld [vmem:[#allocation2 + $0x20] sm:$0xff]
    %v1269 = vld [vmem:[#allocation2 + $0x28] sm:$0xff]
    %v1270 = vld [vmem:[#allocation2 + $0x30] sm:$0xff]
    %v1271 = vld [vmem:[#allocation2 + $0x38] sm:$0xff]
    %v1272 = vld [vmem:[#allocation2 + $0x40] sm:$0xff]
    %v1273 = vld [vmem:[#allocation2 + $0x48] sm:$0xff]
    %v1274 = vld [vmem:[#allocation2 + $0x50] sm:$0xff]
    %v1275 = vld [vmem:[#allocation2 + $0x58] sm:$0xff]
    %v1276 = vld [vmem:[#allocation2 + $0x60] sm:$0xff]
    %v1277 = vld [vmem:[#allocation2 + $0x68] sm:$0xff]
    %v1278 = vld [vmem:[#allocation2 + $0x70] sm:$0xff]
    %v1279 = vld [vmem:[#allocation2 + $0x78] sm:$0xff]
    %v1280 = vld [vmem:[#allocation2 + $0x80] sm:$0xff]
    %v1281 = vld [vmem:[#allocation2 + $0x88] sm:$0xff]
    %v1282 = vld [vmem:[#allocation2 + $0x90] sm:$0xff]
    %v1283 = vld [vmem:[#allocation2 + $0x98] sm:$0xff]
    %v1284 = vld [vmem:[#allocation2 + $0xa0] sm:$0xff]
    %v1285 = vld [vmem:[#allocation2 + $0xa8] sm:$0xff]
    %v1286 = vld [vmem:[#allocation2 + $0xb0] sm:$0xff]
    %v1287 = vld [vmem:[#allocation2 + $0xb8] sm:$0xff]
    %v1288 = vld [vmem:[#allocation2 + $0xc0] sm:$0xff]
    %v1289 = vld [vmem:[#allocation2 + $0xc8] sm:$0xff]
    %v1290 = vld [vmem:[#allocation2 + $0xd0] sm:$0xff]
    %v1291 = vld [vmem:[#allocation2 + $0xd8] sm:$0xff]
    %v1292 = vld [vmem:[#allocation2 + $0xe0] sm:$0xff]
    %v1293 = vld [vmem:[#allocation2 + $0xe8] sm:$0xff]
    %v1294 = vld [vmem:[#allocation2 + $0xf0] sm:$0xff]
    %v1295 = vld [vmem:[#allocation2 + $0xf8] sm:$0xff]
    %v1296 = vld [vmem:[#allocation2 + $0x100] sm:$0xff]
    %v1297 = vld [vmem:[#allocation2 + $0x108] sm:$0xff]
    %v1298 = vld [vmem:[#allocation2 + $0x110] sm:$0xff]
    %v1299 = vld [vmem:[#allocation2 + $0x118] sm:$0xff]
    %v1300 = vld [vmem:[%s5] sm:$0xff]
    %v1301 = vld [vmem:[%s5 + $0x8] sm:$0xff]
    %1303 = vset.pattern.permute.xlu0 0
    %1304 = vperm.xlu0 %1303, %v1300
    %v1305 = vpop.permute.xlu0 %1304
    %1308 = vset.pattern.permute.xlu0 0
    %1309 = vperm.xlu0 %1308, %v1301
    %v1310 = vpop.permute.xlu0 %1309
    %v1313 = vunpack.c.l.b16 %v1262
    %v1314 = vunpack.c.h.b16 %v1262
    %v1315 = vunpack.c.l.b16 %v1263
    %v1316 = vunpack.c.h.b16 %v1263
    %v1317 = vpack.c.b16 %v1315, %v1313
    %v1318 = vpack.c.b16 %v1316, %v1314
    %v1356 = vunpack.c.l.b16 %v1264
    %v1357 = vunpack.c.h.b16 %v1264
    %v1358 = vunpack.c.l.b16 %v1265
    %v1359 = vunpack.c.h.b16 %v1265
    %v1360 = vunpack.c.l.b16 %v1266
    %v1361 = vunpack.c.h.b16 %v1266
    %v1362 = vunpack.c.l.b16 %v1267
    %v1363 = vunpack.c.h.b16 %v1267
    %v1364 = vunpack.c.l.b16 %v1268
    %v1365 = vunpack.c.h.b16 %v1268
    %v1366 = vunpack.c.l.b16 %v1269
    %v1367 = vunpack.c.h.b16 %v1269
    %v1368 = vunpack.c.l.b16 %v1270
    %v1369 = vunpack.c.h.b16 %v1270
    %v1370 = vunpack.c.l.b16 %v1271
    %v1371 = vunpack.c.h.b16 %v1271
    %v1372 = vunpack.c.l.b16 %v1272
    %v1373 = vunpack.c.h.b16 %v1272
    %v1374 = vunpack.c.l.b16 %v1273
    %v1375 = vunpack.c.h.b16 %v1273
    %v1376 = vunpack.c.l.b16 %v1274
    %v1377 = vunpack.c.h.b16 %v1274
    %v1378 = vunpack.c.l.b16 %v1275
    %v1379 = vunpack.c.h.b16 %v1275
    %v1380 = vunpack.c.l.b16 %v1276
    %v1381 = vunpack.c.h.b16 %v1276
    %v1382 = vunpack.c.l.b16 %v1277
    %v1383 = vunpack.c.h.b16 %v1277
    %v1384 = vunpack.c.l.b16 %v1278
    %v1385 = vunpack.c.h.b16 %v1278
    %v1386 = vunpack.c.l.b16 %v1279
    %v1387 = vunpack.c.h.b16 %v1279
    %v1388 = vunpack.c.l.b16 %v1280
    %v1389 = vunpack.c.h.b16 %v1280
    %v1390 = vunpack.c.l.b16 %v1281
    %v1391 = vunpack.c.h.b16 %v1281
    %v1392 = vunpack.c.l.b16 %v1282
    %v1393 = vunpack.c.h.b16 %v1282
    %v1394 = vunpack.c.l.b16 %v1283
    %v1395 = vunpack.c.h.b16 %v1283
    %v1396 = vunpack.c.l.b16 %v1284
    %v1397 = vunpack.c.h.b16 %v1284
    %v1398 = vunpack.c.l.b16 %v1285
    %v1399 = vunpack.c.h.b16 %v1285
    %v1400 = vunpack.c.l.b16 %v1286
    %v1401 = vunpack.c.h.b16 %v1286
    %v1402 = vunpack.c.l.b16 %v1287
    %v1403 = vunpack.c.h.b16 %v1287
    %v1404 = vunpack.c.l.b16 %v1288
    %v1405 = vunpack.c.h.b16 %v1288
    %v1406 = vunpack.c.l.b16 %v1289
    %v1407 = vunpack.c.h.b16 %v1289
    %v1408 = vunpack.c.l.b16 %v1290
    %v1409 = vunpack.c.h.b16 %v1290
    %v1410 = vunpack.c.l.b16 %v1291
    %v1411 = vunpack.c.h.b16 %v1291
    %v1412 = vunpack.c.l.b16 %v1292
    %v1413 = vunpack.c.h.b16 %v1292
    %v1414 = vunpack.c.l.b16 %v1293
    %v1415 = vunpack.c.h.b16 %v1293
    %v1416 = vunpack.c.l.b16 %v1294
    %v1417 = vunpack.c.h.b16 %v1294
    %v1418 = vunpack.c.l.b16 %v1295
    %v1419 = vunpack.c.h.b16 %v1295
    %v1420 = vunpack.c.l.b16 %v1296
    %v1421 = vunpack.c.h.b16 %v1296
    %v1422 = vunpack.c.l.b16 %v1297
    %v1423 = vunpack.c.h.b16 %v1297
    %v1424 = vunpack.c.l.b16 %v1298
    %v1425 = vunpack.c.h.b16 %v1298
    %v1426 = vunpack.c.l.b16 %v1299
    %v1427 = vunpack.c.h.b16 %v1299
    %v1428 = vpack.c.b16 %v1360, %v1356
    %v1429 = vpack.c.b16 %v1361, %v1357
    %v1430 = vpack.c.b16 %v1362, %v1358
    %v1431 = vpack.c.b16 %v1363, %v1359
    %v1432 = vpack.c.b16 %v1368, %v1364
    %v1433 = vpack.c.b16 %v1369, %v1365
    %v1434 = vpack.c.b16 %v1370, %v1366
    %v1435 = vpack.c.b16 %v1371, %v1367
    %v1436 = vpack.c.b16 %v1376, %v1372
    %v1437 = vpack.c.b16 %v1377, %v1373
    %v1438 = vpack.c.b16 %v1378, %v1374
    %v1439 = vpack.c.b16 %v1379, %v1375
    %v1440 = vpack.c.b16 %v1384, %v1380
    %v1441 = vpack.c.b16 %v1385, %v1381
    %v1442 = vpack.c.b16 %v1386, %v1382
    %v1443 = vpack.c.b16 %v1387, %v1383
    %v1444 = vpack.c.b16 %v1392, %v1388
    %v1445 = vpack.c.b16 %v1393, %v1389
    %v1446 = vpack.c.b16 %v1394, %v1390
    %v1447 = vpack.c.b16 %v1395, %v1391
    %v1448 = vpack.c.b16 %v1400, %v1396
    %v1449 = vpack.c.b16 %v1401, %v1397
    %v1450 = vpack.c.b16 %v1402, %v1398
    %v1451 = vpack.c.b16 %v1403, %v1399
    %v1452 = vpack.c.b16 %v1408, %v1404
    %v1453 = vpack.c.b16 %v1409, %v1405
    %v1454 = vpack.c.b16 %v1410, %v1406
    %v1455 = vpack.c.b16 %v1411, %v1407
    %v1456 = vpack.c.b16 %v1416, %v1412
    %v1457 = vpack.c.b16 %v1417, %v1413
    %v1458 = vpack.c.b16 %v1418, %v1414
    %v1459 = vpack.c.b16 %v1419, %v1415
    %v1460 = vpack.c.b16 %v1424, %v1420
    %v1461 = vpack.c.b16 %v1425, %v1421
    %v1462 = vpack.c.b16 %v1426, %v1422
    %v1463 = vpack.c.b16 %v1427, %v1423
    %v1501 = vsel %vm730, %v1318, 0
    %1503 = vmatpush.bf16.msra.mxu0 %v1456
    %1504 = vmatpush.bf16.msra.mxu0 %v1452
    %1505 = vmatpush.bf16.msra.mxu0 %v1448
    %1506 = vmatpush.bf16.msra.mxu0 %v1444
    %1507 = vmatpush.bf16.msra.mxu0 %v1440
    %1508 = vmatpush.bf16.msra.mxu0 %v1436
    %1509 = vmatpush.bf16.msra.mxu0 %v1432
    %1510 = vmatpush.bf16.msra.mxu0 %v1428
    %1511 = vmatmul.bf16.gmra.mxu0 %v1317
    %v1512 = vpop.f32.mrf.mxu0
    %v1513 = vadd.f32 %v1305, %v1512
    %v1514 = vpop.f32.mrf.mxu0
    %1515 = vdwg.mxu0
    %1516 = vmatpush.bf16.msra.mxu0 0
    %1517 = vmatpush.bf16.msra.mxu0 0
    %1518 = vmatpush.bf16.msra.mxu0 0
    %1519 = vmatpush.bf16.msra.mxu0 0
    %1520 = vmatpush.bf16.msra.mxu0 0
    %1521 = vmatpush.bf16.msra.mxu0 0
    %1522 = vmatpush.bf16.msra.mxu0 0
    %1523 = vmatpush.bf16.msra.mxu0 %v1460
    %1524 = vmatmul.bf16.gmra.mxu0 %v1501
    %v1525 = vpop.f32.mrf.mxu0
    %v1526 = vadd.f32 %v1513, %v1525
    %v1527 = vpop.f32.mrf.mxu0
    %1528 = vdwg.mxu0
    %1529 = vmatpush.bf16.msra.mxu0 %v1457
    %1530 = vmatpush.bf16.msra.mxu0 %v1453
    %1531 = vmatpush.bf16.msra.mxu0 %v1449
    %1532 = vmatpush.bf16.msra.mxu0 %v1445
    %1533 = vmatpush.bf16.msra.mxu0 %v1441
    %1534 = vmatpush.bf16.msra.mxu0 %v1437
    %1535 = vmatpush.bf16.msra.mxu0 %v1433
    %1536 = vmatpush.bf16.msra.mxu0 %v1429
    %1537 = vmatmul.bf16.gmra.mxu0 %v1317
    %v1538 = vpop.f32.mrf.mxu0
    %v1539 = vadd.f32 %v1305, %v1538
    %v1540 = vpop.f32.mrf.mxu0
    %1541 = vdwg.mxu0
    %1542 = vmatpush.bf16.msra.mxu0 0
    %1543 = vmatpush.bf16.msra.mxu0 0
    %1544 = vmatpush.bf16.msra.mxu0 0
    %1545 = vmatpush.bf16.msra.mxu0 0
    %1546 = vmatpush.bf16.msra.mxu0 0
    %1547 = vmatpush.bf16.msra.mxu0 0
    %1548 = vmatpush.bf16.msra.mxu0 0
    %1549 = vmatpush.bf16.msra.mxu0 %v1461
    %1550 = vmatmul.bf16.gmra.mxu0 %v1501
    %v1551 = vpop.f32.mrf.mxu0
    %v1552 = vadd.f32 %v1539, %v1551
    %v1553 = vpop.f32.mrf.mxu0
    %1554 = vdwg.mxu0
    %1555 = vmatpush.bf16.msra.mxu0 %v1458
    %1556 = vmatpush.bf16.msra.mxu0 %v1454
    %1557 = vmatpush.bf16.msra.mxu0 %v1450
    %1558 = vmatpush.bf16.msra.mxu0 %v1446
    %1559 = vmatpush.bf16.msra.mxu0 %v1442
    %1560 = vmatpush.bf16.msra.mxu0 %v1438
    %1561 = vmatpush.bf16.msra.mxu0 %v1434
    %1562 = vmatpush.bf16.msra.mxu0 %v1430
    %1563 = vmatmul.bf16.gmra.mxu0 %v1317
    %v1564 = vpop.f32.mrf.mxu0
    %v1565 = vadd.f32 %v1305, %v1564
    %v1566 = vpop.f32.mrf.mxu0
    %1567 = vdwg.mxu0
    %1568 = vmatpush.bf16.msra.mxu0 0
    %1569 = vmatpush.bf16.msra.mxu0 0
    %1570 = vmatpush.bf16.msra.mxu0 0
    %1571 = vmatpush.bf16.msra.mxu0 0
    %1572 = vmatpush.bf16.msra.mxu0 0
    %1573 = vmatpush.bf16.msra.mxu0 0
    %1574 = vmatpush.bf16.msra.mxu0 0
    %1575 = vmatpush.bf16.msra.mxu0 %v1462
    %1576 = vmatmul.bf16.gmra.mxu0 %v1501
    %v1577 = vpop.f32.mrf.mxu0
    %v1578 = vadd.f32 %v1565, %v1577
    %v1579 = vpop.f32.mrf.mxu0
    %1580 = vdwg.mxu0
    %1581 = vmatpush.bf16.msra.mxu0 %v1459
    %1582 = vmatpush.bf16.msra.mxu0 %v1455
    %1583 = vmatpush.bf16.msra.mxu0 %v1451
    %1584 = vmatpush.bf16.msra.mxu0 %v1447
    %1585 = vmatpush.bf16.msra.mxu0 %v1443
    %1586 = vmatpush.bf16.msra.mxu0 %v1439
    %1587 = vmatpush.bf16.msra.mxu0 %v1435
    %1588 = vmatpush.bf16.msra.mxu0 %v1431
    %1589 = vmatmul.bf16.gmra.mxu0 %v1317
    %v1590 = vpop.f32.mrf.mxu0
    %v1591 = vadd.f32 %v1305, %v1590
    %v1592 = vpop.f32.mrf.mxu0
    %1593 = vdwg.mxu0
    %1594 = vmatpush.bf16.msra.mxu0 0
    %1595 = vmatpush.bf16.msra.mxu0 0
    %1596 = vmatpush.bf16.msra.mxu0 0
    %1597 = vmatpush.bf16.msra.mxu0 0
    %1598 = vmatpush.bf16.msra.mxu0 0
    %1599 = vmatpush.bf16.msra.mxu0 0
    %1600 = vmatpush.bf16.msra.mxu0 0
    %1601 = vmatpush.bf16.msra.mxu0 %v1463
    %1602 = vmatmul.bf16.gmra.mxu0 %v1501
    %v1603 = vpop.f32.mrf.mxu0
    %v1604 = vadd.f32 %v1591, %v1603
    %v1605 = vpop.f32.mrf.mxu0
    %1606 = vdwg.mxu0
    %v1607 = vmax.f32 %v1526, 0.0
    %v1608 = vmax.f32 %v1552, 0.0
    %v1609 = vmax.f32 %v1578, 0.0
    %v1610 = vmax.f32 %v1604, 0.0
    %1611 = vst [vmem:[#allocation8] sm:$0xff] %v1607
    %1612 = vst [vmem:[#allocation8 + $0x8] sm:$0xff] %v1608
    %s1613 = scalar_lea.vmem [#allocation8], 16
    %1614 = vst [vmem:[%s1613] sm:$0xff] %v1609
    %1615 = vst [vmem:[%s1613 + $0x8] sm:$0xff] %v1610
    // Predicated region
    $region34: #{tpu_custom_call.1} parent=1 // pred_check
      _
    $region35: #{tpu_custom_call.1} parent=1 // pred_check_branch
      %1617 = sbr.rel (0) target = $region37
    $region36: #{tpu_custom_call.1} parent=1 // pred_region
      %1619 = vsyncadd [#allocation5], 0
      %s1620 = sshll.u32 [#allocation8], 4
      %s1621 = int_to_ptr.vmem [resolvable:$true] %s1620
      %s1622 = sshll.u32 %s6, 4
      %s1623 = int_to_ptr.hbm [resolvable:$true] %s1622
      %1628 = dma.vmem_to_hbm [thread:$0]  %s1621, 512, %s1623, [#allocation5], 256, 256, 16
    $region37: #{tpu_custom_call.1} parent=1 // pred_fallthru
      _
    // Predicated region
    $region38: #{tpu_custom_call.1} parent=1 // pred_check
      _
    $region39: #{tpu_custom_call.1} parent=1 // pred_check_branch
      %1630 = sbr.rel (0) target = $region41
    $region40: #{tpu_custom_call.1} parent=1 // pred_region
      %1632 = dma.done [#allocation5], 512
    $region41: #{tpu_custom_call.1} parent=1 // pred_fallthru
      _
    %1633 = vsyncpa [#allocation4], 1
    %1634 = vsyncpa [#allocation7], 1
    %1635 = vsyncpa [#allocation5], 1

</llo_original>
